<compile_context>
chip_gen: v7x
topology: tpu7x:2x2x1
jax: 0.10.0
libtpu: 0.0.40
codegen_flags: <defaults>
</compile_context>

<pallas_src>
import functools

import numpy as np
import jax
import jax.numpy as jnp
from jax import lax
from jax.experimental import pallas as pl
from jax.experimental.pallas import tpu as pltpu


def _equalize_channel_kernel(x_ref, mean_ref, o_ref, *,
                             n_chunks, chunk, segments, dg, denom, eps, max_,
                             slope, n_valid):
    """Equalize + mean-subtract one channel of one image.

    x_ref, mean_ref, o_ref: (R, L) float32 VMEM views of a flattened channel.
    dg      : grid spacing max_/segments (uniform torch.linspace grid).
    denom   : im_size**2 (the module's hardcoded CDF normalization constant).
    n_valid : actual element count R*L (used by the shift-the-clip correction).
    """
    L = x_ref.shape[1]

    def row0(i):
        return pl.multiple_of(i * chunk, chunk)

    # ---- Pass 1: fused global min/max of the raw input channel -------------
    def minmax_body(i, carry):
        mn, mx = carry
        xc = x_ref[pl.ds(row0(i), chunk), :]
        return jnp.minimum(mn, xc), jnp.maximum(mx, xc)

    mn, mx = lax.fori_loop(
        0, n_chunks, minmax_body,
        (jnp.full((chunk, L), jnp.inf, jnp.float32),
         jnp.full((chunk, L), -jnp.inf, jnp.float32)))
    xmin = jnp.min(mn)
    xmax = jnp.max(mx)

    # `temp = 127.5*x + 127.5` folded into the first normalization:
    #   c = (temp - temp_min) * max_/(temp_max - temp_min + eps)
    #     = (x - xmin) * s0,  s0 = 127.5*max_ / (127.5*(xmax - xmin) + eps)
    s0 = (127.5 * max_) / (127.5 * (xmax - xmin) + eps)

    # Soft-CDF: F_hat[j] = sum(clip(slope*(0.5/slope + g_j - c), 0, 1)) / denom
    # (ReLU redundant for slope > 0).  With t = 0.5 - slope*c = A - B*x and
    # sg_j = slope*g_j, shift-the-clip gives
    #   sum(clip(t + sg, 0, 1)) = sum(clip(t, -sg, 1 - sg)) + n_valid*sg.
    B = slope * s0
    A = 0.5 + B * xmin
    sg = [float(slope) * float(dg) * j for j in range(segments + 1)]

    ones = jnp.ones((chunk, L), jnp.float32)
    A_b = A * ones                      # hoisted splats (loop-invariant)
    B_b = B * ones

    # ---- Pass 2: chunked soft-CDF partial sums (kept in vregs) -------------
    def cdf_body(i, accs):
        xc = x_ref[pl.ds(row0(i), chunk), :]
        t = A_b - B_b * xc
        return tuple(accs[j] + jnp.clip(t, -sg[j], 1.0 - sg[j])
                     for j in range(segments + 1))

    accs = lax.fori_loop(
        0, n_chunks, cdf_body,
        tuple(jnp.zeros((chunk, L), jnp.float32) for _ in range(segments + 1)))

    inv_denom = 1.0 / denom
    f_hat = [(jnp.sum(accs[j]) + n_valid * sg[j]) * inv_denom
             for j in range(segments + 1)]

    # Sum-of-ramps form of the piecewise-linear remap (u = c/dg):
    #   c_new = f_hat[0] + sum_i (f_hat[i+1]-f_hat[i]) * clip(u - i, 0, 1)
    #         = const0  + sum_i delta_i * clip(u, i, i+1)
    deltas = [f_hat[j + 1] - f_hat[j] for j in range(segments)]
    const0 = f_hat[0]
    for j in range(segments):
        const0 = const0 - deltas[j] * float(j)
    inv_dg = 1.0 / dg

    delta_b = [d * ones for d in deltas]        # hoisted splats
    const0_b = const0 * ones
    s0_b = s0 * ones
    xmins0_b = (xmin * s0) * ones

    # ---- Pass 3: chunked remap + fused post-remap min/max ------------------
    def remap_body(i, carry):
        mn2, mx2 = carry
        r0 = row0(i)
        xc = x_ref[pl.ds(r0, chunk), :]
        c = xc * s0_b - xmins0_b                 # == (xc - xmin) * s0
        u = c * inv_dg
        # Balanced tree sum of the 20 ramp terms (breaks the serial add chain).
        terms = [delta_b[j] * jnp.clip(u, float(j), float(j + 1))
                 for j in range(segments)]
        terms.append(const0_b)
        while len(terms) > 1:
            nxt = [terms[p] + terms[p + 1] for p in range(0, len(terms) - 1, 2)]
            if len(terms) % 2:
                nxt.append(terms[-1])
            terms = nxt
        c_new = terms[0]
        # The torch loop uses strict inequalities on both segment ends: values
        # exactly on a grid point (notably the channel minimum, which
        # normalizes to exactly 0) and values >= max_ are left untouched.
        # k*dg is exact for integer k <= segments, so the hit test is exact.
        k = (u + 0.5).astype(jnp.int32).astype(jnp.float32)
        untouched = jnp.logical_or(c == k * dg, c >= max_)
        c_fin = jnp.where(untouched, c, c_new)
        o_ref[pl.ds(r0, chunk), :] = c_fin       # o_ref doubles as VMEM temp
        return jnp.minimum(mn2, c_fin), jnp.maximum(mx2, c_fin)

    mn2, mx2 = lax.fori_loop(
        0, n_chunks, remap_body,
        (jnp.full((chunk, L), jnp.inf, jnp.float32),
         jnp.full((chunk, L), -jnp.inf, jnp.float32)))
    cmin = jnp.min(mn2)
    cmax = jnp.max(mx2)
    s1 = max_ / (cmax - cmin + eps)

    # ---- Pass 4: fused final rescale + Caffe mean subtraction --------------
    @pl.loop(0, n_chunks)
    def _(i):
        r0 = row0(i)
        v = o_ref[pl.ds(r0, chunk), :]
        o_ref[pl.ds(r0, chunk), :] = (
            (v - cmin) * s1 - mean_ref[pl.ds(r0, chunk), :])


def modelderm_preprocess(x, mean, *, segments=20, eps=1e-5, max_=255.0,
                         slope=0.1, im_size=224):
    """Pallas implementation of ModelDermClassifier.forward up to (and not
    including) the external Caffe backbone.

    Args:
      x:    (N, 3, H, W) float32, values in (-1, 1).
      mean: (3, H, W) float32 Caffe mean image (BGR order, 0..255 range).
      im_size: Equalize's hardcoded normalization constant (224 in the module).
    Returns:
      (N, 3, H, W) float32 preprocessed tensor (equalized BGR image minus mean).
    """
    N, C, H, W = x.shape
    assert mean.shape == (C, H, W)
    assert C == 3, "ModelDermClassifier assumes 3-channel RGB input"

    x = x.astype(jnp.float32)
    mean = mean.astype(jnp.float32)

    # Lane-dense layout: flatten each (H, W) channel to (H*W/128, 128).  Free
    # (contiguous) reshape; every kernel op is channel-global.  The fallback
    # never triggers for the model's 224x224 inputs (50176 = 392*128).
    hw = H * W
    if hw % 128 == 0:
        R, L = hw // 128, 128
    else:
        R, L = H, W   # correct but carries masked lane tails; never hit at 224
    x_r = x.reshape(N, C, R, L)
    mean_r = mean.reshape(C, R, L)

    chunk = next(cc for cc in (8, 4, 2, 1) if R % cc == 0)
    n_chunks = R // chunk

    kernel = functools.partial(
        _equalize_channel_kernel,
        n_chunks=n_chunks, chunk=chunk, segments=int(segments),
        dg=float(max_) / float(segments), denom=float(im_size) ** 2,
        eps=float(eps), max_=float(max_), slope=float(slope),
        n_valid=float(R * L))

    out = pl.pallas_call(
        kernel,
        out_shape=jax.ShapeDtypeStruct((N, C, R, L), jnp.float32),
        # C outermost: mean block index constant across inner N -> DMA'd only
        # C times.  (At batch 1 this is 3 parallel steps; v7x megacore splits
        # them 2:1 — process >=2 images per call for balanced cores.)
        grid=(C, N),
        in_specs=[
            # RGB -> BGR flip (temp = temp[:, [2, 1, 0]]) folded into the
            # index_map: output channel c reads input channel 2 - c.
            pl.BlockSpec((None, None, R, L), lambda c, n: (n, 2 - c, 0, 0)),
            pl.BlockSpec((None, R, L), lambda c, n: (c, 0, 0)),
        ],
        out_specs=pl.BlockSpec((None, None, R, L), lambda c, n: (n, c, 0, 0)),
        compiler_params=pltpu.CompilerParams(
            dimension_semantics=("parallel", "parallel")),
    )(x_r, mean_r)

    return out.reshape(N, C, H, W)


if __name__ == "__main__":
    # Small shapes consistent with the module: batched 3-channel square images.
    N, C, H, W = 2, 3, 16, 16

    key = jax.random.PRNGKey(0)
    kx, km = jax.random.split(key)
    # Input images scaled to (-1, 1), as the wrapper expects.
    x = jax.random.uniform(kx, (N, C, H, W), jnp.float32, minval=-1.0, maxval=1.0)
    # Deterministic synthetic stand-in for the mean224x224.binaryproto buffer
    # (original shape (3, 224, 224), values in [0, 255]).
    mean = jax.random.uniform(km, (C, H, W), jnp.float32, minval=0.0, maxval=255.0)

    # im_size is passed as H so the Equalize normalization constant matches the
    # shrunk spatial size (the original module hardcodes 224 for 224x224 input).
    out = modelderm_preprocess(x, mean, im_size=H)
    out = jax.block_until_ready(out)

    # Sanity checks.  (A strict elementwise cross-check against an off-device
    # reference is ill-conditioned: the algorithm places the channel maximum
    # within ~1 ulp of a strict-inequality segment boundary, so boundary
    # membership is rounding-dependent between float32 implementations.)
    assert out.shape == (N, C, H, W)
    assert out.dtype == jnp.float32
    out_np = np.asarray(out)
    assert np.all(np.isfinite(out_np))
    # Equalized channel lies in [0, 255]; mean lies in [0, 255].
    assert out_np.min() >= -260.0 and out_np.max() <= 260.0

    print("KERNEL_OK")
</pallas_src>

<mosaic_0001>
module attributes {stable_mosaic.version = 11 : i64} {
  func.func @_equalize_channel_kernel(%arg0: i32, %arg1: i32, %arg2: memref<1x1x2x128xf32, #tpu.memory_space<vmem>>, %arg3: memref<1x2x128xf32, #tpu.memory_space<vmem>>, %arg4: memref<1x1x2x128xf32, #tpu.memory_space<vmem>>) attributes {dimension_semantics = [#tpu.dimension_semantics<parallel>, #tpu.dimension_semantics<parallel>], iteration_bounds = array<i64: 3, 2>, scalar_prefetch = 0 : i64, scratch_operands = 0 : i64, tpu.core_type = #tpu.core_type<tc>, window_params = [{transform_indices = @transform_0, window_bounds = array<i64: 1, 1, 2, 128>}, {transform_indices = @transform_1, window_bounds = array<i64: 1, 2, 128>}, {transform_indices = @transform_2, window_bounds = array<i64: 1, 1, 2, 128>}]} {
    %cst = arith.constant 0x7F800000 : f32
    %0 = vector.broadcast %cst : f32 to vector<2x128xf32>
    %cst_0 = arith.constant 0xFF800000 : f32
    %1 = vector.broadcast %cst_0 : f32 to vector<2x128xf32>
    %c0_i32 = arith.constant 0 : i32
    %c2_i32 = arith.constant 2 : i32
    %2 = arith.muli %c0_i32, %c2_i32 : i32
    %3 = tpu.assume_multiple %2, 2 : i32
    %c0 = arith.constant 0 : index
    %c0_1 = arith.constant 0 : index
    %4 = arith.index_cast %3 : i32 to index
    %c0_2 = arith.constant 0 : index
    %5 = vector.load %arg2[%c0, %c0_1, %4, %c0_2] : memref<1x1x2x128xf32, #tpu.memory_space<vmem>>, vector<1x1x2x128xf32>
    %6 = vector.shape_cast %5 : vector<1x1x2x128xf32> to vector<2x128xf32>
    %7 = arith.minimumf %0, %6 : vector<2x128xf32>
    %8 = arith.maximumf %1, %6 : vector<2x128xf32>
    %c1_i32 = arith.constant 1 : i32
    %9 = vector.shape_cast %7 : vector<2x128xf32> to vector<1x2x128xf32>
    %cst_3 = arith.constant dense<0x7F800000> : vector<1xf32>
    %10 = vector.multi_reduction <minimumf>, %9, %cst_3 [1, 2] : vector<1x2x128xf32> to vector<1xf32>
    %11 = vector.shape_cast %10 : vector<1xf32> to vector<1x1x1xf32>
    %12 = vector.extract %11[0, 0, 0] : f32 from vector<1x1x1xf32>
    %13 = vector.shape_cast %8 : vector<2x128xf32> to vector<1x2x128xf32>
    %cst_4 = arith.constant dense<0xFF800000> : vector<1xf32>
    %14 = vector.multi_reduction <maximumf>, %13, %cst_4 [1, 2] : vector<1x2x128xf32> to vector<1xf32>
    %15 = vector.shape_cast %14 : vector<1xf32> to vector<1x1x1xf32>
    %16 = vector.extract %15[0, 0, 0] : f32 from vector<1x1x1xf32>
    %17 = arith.subf %16, %12 : f32
    %cst_5 = arith.constant 1.275000e+02 : f32
    %18 = arith.mulf %cst_5, %17 : f32
    %cst_6 = arith.constant 9.99999974E-6 : f32
    %19 = arith.addf %18, %cst_6 : f32
    %cst_7 = arith.constant 3.251250e+04 : f32
    %20 = arith.divf %cst_7, %19 : f32
    %cst_8 = arith.constant 1.000000e-01 : f32
    %21 = arith.mulf %cst_8, %20 : f32
    %22 = arith.mulf %21, %12 : f32
    %cst_9 = arith.constant 5.000000e-01 : f32
    %23 = arith.addf %cst_9, %22 : f32
    %cst_10 = arith.constant 1.000000e+00 : f32
    %24 = vector.broadcast %cst_10 : f32 to vector<2x128xf32>
    %25 = vector.broadcast %23 : f32 to vector<2x128xf32>
    %26 = arith.mulf %25, %24 : vector<2x128xf32>
    %27 = vector.broadcast %21 : f32 to vector<2x128xf32>
    %28 = arith.mulf %27, %24 : vector<2x128xf32>
    %cst_11 = arith.constant 0.000000e+00 : f32
    %29 = vector.broadcast %cst_11 : f32 to vector<2x128xf32>
    %cst_12 = arith.constant 0.000000e+00 : f32
    %30 = vector.broadcast %cst_12 : f32 to vector<2x128xf32>
    %cst_13 = arith.constant 0.000000e+00 : f32
    %31 = vector.broadcast %cst_13 : f32 to vector<2x128xf32>
    %cst_14 = arith.constant 0.000000e+00 : f32
    %32 = vector.broadcast %cst_14 : f32 to vector<2x128xf32>
    %cst_15 = arith.constant 0.000000e+00 : f32
    %33 = vector.broadcast %cst_15 : f32 to vector<2x128xf32>
    %cst_16 = arith.constant 0.000000e+00 : f32
    %34 = vector.broadcast %cst_16 : f32 to vector<2x128xf32>
    %cst_17 = arith.constant 0.000000e+00 : f32
    %35 = vector.broadcast %cst_17 : f32 to vector<2x128xf32>
    %cst_18 = arith.constant 0.000000e+00 : f32
    %36 = vector.broadcast %cst_18 : f32 to vector<2x128xf32>
    %cst_19 = arith.constant 0.000000e+00 : f32
    %37 = vector.broadcast %cst_19 : f32 to vector<2x128xf32>
    %cst_20 = arith.constant 0.000000e+00 : f32
    %38 = vector.broadcast %cst_20 : f32 to vector<2x128xf32>
    %cst_21 = arith.constant 0.000000e+00 : f32
    %39 = vector.broadcast %cst_21 : f32 to vector<2x128xf32>
    %cst_22 = arith.constant 0.000000e+00 : f32
    %40 = vector.broadcast %cst_22 : f32 to vector<2x128xf32>
    %cst_23 = arith.constant 0.000000e+00 : f32
    %41 = vector.broadcast %cst_23 : f32 to vector<2x128xf32>
    %cst_24 = arith.constant 0.000000e+00 : f32
    %42 = vector.broadcast %cst_24 : f32 to vector<2x128xf32>
    %cst_25 = arith.constant 0.000000e+00 : f32
    %43 = vector.broadcast %cst_25 : f32 to vector<2x128xf32>
    %cst_26 = arith.constant 0.000000e+00 : f32
    %44 = vector.broadcast %cst_26 : f32 to vector<2x128xf32>
    %cst_27 = arith.constant 0.000000e+00 : f32
    %45 = vector.broadcast %cst_27 : f32 to vector<2x128xf32>
    %cst_28 = arith.constant 0.000000e+00 : f32
    %46 = vector.broadcast %cst_28 : f32 to vector<2x128xf32>
    %cst_29 = arith.constant 0.000000e+00 : f32
    %47 = vector.broadcast %cst_29 : f32 to vector<2x128xf32>
    %cst_30 = arith.constant 0.000000e+00 : f32
    %48 = vector.broadcast %cst_30 : f32 to vector<2x128xf32>
    %cst_31 = arith.constant 0.000000e+00 : f32
    %49 = vector.broadcast %cst_31 : f32 to vector<2x128xf32>
    %c0_i32_32 = arith.constant 0 : i32
    %c2_i32_33 = arith.constant 2 : i32
    %50 = arith.muli %c0_i32_32, %c2_i32_33 : i32
    %51 = tpu.assume_multiple %50, 2 : i32
    %c0_34 = arith.constant 0 : index
    %c0_35 = arith.constant 0 : index
    %52 = arith.index_cast %51 : i32 to index
    %c0_36 = arith.constant 0 : index
    %53 = vector.load %arg2[%c0_34, %c0_35, %52, %c0_36] : memref<1x1x2x128xf32, #tpu.memory_space<vmem>>, vector<1x1x2x128xf32>
    %54 = vector.shape_cast %53 : vector<1x1x2x128xf32> to vector<2x128xf32>
    %55 = arith.mulf %28, %54 : vector<2x128xf32>
    %56 = arith.subf %26, %55 : vector<2x128xf32>
    %cst_37 = arith.constant -0.000000e+00 : f32
    %cst_38 = arith.constant 1.000000e+00 : f32
    %57 = vector.broadcast %cst_37 : f32 to vector<2x128xf32>
    %58 = arith.maximumf %57, %56 : vector<2x128xf32>
    %59 = vector.broadcast %cst_38 : f32 to vector<2x128xf32>
    %60 = arith.minimumf %59, %58 : vector<2x128xf32>
    %61 = arith.addf %29, %60 : vector<2x128xf32>
    %cst_39 = arith.constant -1.275000e+00 : f32
    %cst_40 = arith.constant -2.750000e-01 : f32
    %62 = vector.broadcast %cst_39 : f32 to vector<2x128xf32>
    %63 = arith.maximumf %62, %56 : vector<2x128xf32>
    %64 = vector.broadcast %cst_40 : f32 to vector<2x128xf32>
    %65 = arith.minimumf %64, %63 : vector<2x128xf32>
    %66 = arith.addf %30, %65 : vector<2x128xf32>
    %cst_41 = arith.constant -2.550000e+00 : f32
    %cst_42 = arith.constant -1.550000e+00 : f32
    %67 = vector.broadcast %cst_41 : f32 to vector<2x128xf32>
    %68 = arith.maximumf %67, %56 : vector<2x128xf32>
    %69 = vector.broadcast %cst_42 : f32 to vector<2x128xf32>
    %70 = arith.minimumf %69, %68 : vector<2x128xf32>
    %71 = arith.addf %31, %70 : vector<2x128xf32>
    %cst_43 = arith.constant -3.825000e+00 : f32
    %cst_44 = arith.constant -2.825000e+00 : f32
    %72 = vector.broadcast %cst_43 : f32 to vector<2x128xf32>
    %73 = arith.maximumf %72, %56 : vector<2x128xf32>
    %74 = vector.broadcast %cst_44 : f32 to vector<2x128xf32>
    %75 = arith.minimumf %74, %73 : vector<2x128xf32>
    %76 = arith.addf %32, %75 : vector<2x128xf32>
    %cst_45 = arith.constant -5.100000e+00 : f32
    %cst_46 = arith.constant -4.100000e+00 : f32
    %77 = vector.broadcast %cst_45 : f32 to vector<2x128xf32>
    %78 = arith.maximumf %77, %56 : vector<2x128xf32>
    %79 = vector.broadcast %cst_46 : f32 to vector<2x128xf32>
    %80 = arith.minimumf %79, %78 : vector<2x128xf32>
    %81 = arith.addf %33, %80 : vector<2x128xf32>
    %cst_47 = arith.constant -6.375000e+00 : f32
    %cst_48 = arith.constant -5.375000e+00 : f32
    %82 = vector.broadcast %cst_47 : f32 to vector<2x128xf32>
    %83 = arith.maximumf %82, %56 : vector<2x128xf32>
    %84 = vector.broadcast %cst_48 : f32 to vector<2x128xf32>
    %85 = arith.minimumf %84, %83 : vector<2x128xf32>
    %86 = arith.addf %34, %85 : vector<2x128xf32>
    %cst_49 = arith.constant -7.650000e+00 : f32
    %cst_50 = arith.constant -6.650000e+00 : f32
    %87 = vector.broadcast %cst_49 : f32 to vector<2x128xf32>
    %88 = arith.maximumf %87, %56 : vector<2x128xf32>
    %89 = vector.broadcast %cst_50 : f32 to vector<2x128xf32>
    %90 = arith.minimumf %89, %88 : vector<2x128xf32>
    %91 = arith.addf %35, %90 : vector<2x128xf32>
    %cst_51 = arith.constant -8.925000e+00 : f32
    %cst_52 = arith.constant -7.925000e+00 : f32
    %92 = vector.broadcast %cst_51 : f32 to vector<2x128xf32>
    %93 = arith.maximumf %92, %56 : vector<2x128xf32>
    %94 = vector.broadcast %cst_52 : f32 to vector<2x128xf32>
    %95 = arith.minimumf %94, %93 : vector<2x128xf32>
    %96 = arith.addf %36, %95 : vector<2x128xf32>
    %cst_53 = arith.constant -1.020000e+01 : f32
    %cst_54 = arith.constant -9.1999998 : f32
    %97 = vector.broadcast %cst_53 : f32 to vector<2x128xf32>
    %98 = arith.maximumf %97, %56 : vector<2x128xf32>
    %99 = vector.broadcast %cst_54 : f32 to vector<2x128xf32>
    %100 = arith.minimumf %99, %98 : vector<2x128xf32>
    %101 = arith.addf %37, %100 : vector<2x128xf32>
    %cst_55 = arith.constant -1.147500e+01 : f32
    %cst_56 = arith.constant -1.047500e+01 : f32
    %102 = vector.broadcast %cst_55 : f32 to vector<2x128xf32>
    %103 = arith.maximumf %102, %56 : vector<2x128xf32>
    %104 = vector.broadcast %cst_56 : f32 to vector<2x128xf32>
    %105 = arith.minimumf %104, %103 : vector<2x128xf32>
    %106 = arith.addf %38, %105 : vector<2x128xf32>
    %cst_57 = arith.constant -1.275000e+01 : f32
    %cst_58 = arith.constant -1.175000e+01 : f32
    %107 = vector.broadcast %cst_57 : f32 to vector<2x128xf32>
    %108 = arith.maximumf %107, %56 : vector<2x128xf32>
    %109 = vector.broadcast %cst_58 : f32 to vector<2x128xf32>
    %110 = arith.minimumf %109, %108 : vector<2x128xf32>
    %111 = arith.addf %39, %110 : vector<2x128xf32>
    %cst_59 = arith.constant -1.402500e+01 : f32
    %cst_60 = arith.constant -1.302500e+01 : f32
    %112 = vector.broadcast %cst_59 : f32 to vector<2x128xf32>
    %113 = arith.maximumf %112, %56 : vector<2x128xf32>
    %114 = vector.broadcast %cst_60 : f32 to vector<2x128xf32>
    %115 = arith.minimumf %114, %113 : vector<2x128xf32>
    %116 = arith.addf %40, %115 : vector<2x128xf32>
    %cst_61 = arith.constant -1.530000e+01 : f32
    %cst_62 = arith.constant -1.430000e+01 : f32
    %117 = vector.broadcast %cst_61 : f32 to vector<2x128xf32>
    %118 = arith.maximumf %117, %56 : vector<2x128xf32>
    %119 = vector.broadcast %cst_62 : f32 to vector<2x128xf32>
    %120 = arith.minimumf %119, %118 : vector<2x128xf32>
    %121 = arith.addf %41, %120 : vector<2x128xf32>
    %cst_63 = arith.constant -1.657500e+01 : f32
    %cst_64 = arith.constant -1.557500e+01 : f32
    %122 = vector.broadcast %cst_63 : f32 to vector<2x128xf32>
    %123 = arith.maximumf %122, %56 : vector<2x128xf32>
    %124 = vector.broadcast %cst_64 : f32 to vector<2x128xf32>
    %125 = arith.minimumf %124, %123 : vector<2x128xf32>
    %126 = arith.addf %42, %125 : vector<2x128xf32>
    %cst_65 = arith.constant -1.785000e+01 : f32
    %cst_66 = arith.constant -1.685000e+01 : f32
    %127 = vector.broadcast %cst_65 : f32 to vector<2x128xf32>
    %128 = arith.maximumf %127, %56 : vector<2x128xf32>
    %129 = vector.broadcast %cst_66 : f32 to vector<2x128xf32>
    %130 = arith.minimumf %129, %128 : vector<2x128xf32>
    %131 = arith.addf %43, %130 : vector<2x128xf32>
    %cst_67 = arith.constant -1.912500e+01 : f32
    %cst_68 = arith.constant -1.812500e+01 : f32
    %132 = vector.broadcast %cst_67 : f32 to vector<2x128xf32>
    %133 = arith.maximumf %132, %56 : vector<2x128xf32>
    %134 = vector.broadcast %cst_68 : f32 to vector<2x128xf32>
    %135 = arith.minimumf %134, %133 : vector<2x128xf32>
    %136 = arith.addf %44, %135 : vector<2x128xf32>
    %cst_69 = arith.constant -2.040000e+01 : f32
    %cst_70 = arith.constant -1.940000e+01 : f32
    %137 = vector.broadcast %cst_69 : f32 to vector<2x128xf32>
    %138 = arith.maximumf %137, %56 : vector<2x128xf32>
    %139 = vector.broadcast %cst_70 : f32 to vector<2x128xf32>
    %140 = arith.minimumf %139, %138 : vector<2x128xf32>
    %141 = arith.addf %45, %140 : vector<2x128xf32>
    %cst_71 = arith.constant -2.167500e+01 : f32
    %cst_72 = arith.constant -2.067500e+01 : f32
    %142 = vector.broadcast %cst_71 : f32 to vector<2x128xf32>
    %143 = arith.maximumf %142, %56 : vector<2x128xf32>
    %144 = vector.broadcast %cst_72 : f32 to vector<2x128xf32>
    %145 = arith.minimumf %144, %143 : vector<2x128xf32>
    %146 = arith.addf %46, %145 : vector<2x128xf32>
    %cst_73 = arith.constant -2.295000e+01 : f32
    %cst_74 = arith.constant -2.195000e+01 : f32
    %147 = vector.broadcast %cst_73 : f32 to vector<2x128xf32>
    %148 = arith.maximumf %147, %56 : vector<2x128xf32>
    %149 = vector.broadcast %cst_74 : f32 to vector<2x128xf32>
    %150 = arith.minimumf %149, %148 : vector<2x128xf32>
    %151 = arith.addf %47, %150 : vector<2x128xf32>
    %cst_75 = arith.constant -2.422500e+01 : f32
    %cst_76 = arith.constant -2.322500e+01 : f32
    %152 = vector.broadcast %cst_75 : f32 to vector<2x128xf32>
    %153 = arith.maximumf %152, %56 : vector<2x128xf32>
    %154 = vector.broadcast %cst_76 : f32 to vector<2x128xf32>
    %155 = arith.minimumf %154, %153 : vector<2x128xf32>
    %156 = arith.addf %48, %155 : vector<2x128xf32>
    %cst_77 = arith.constant -2.550000e+01 : f32
    %cst_78 = arith.constant -2.450000e+01 : f32
    %157 = vector.broadcast %cst_77 : f32 to vector<2x128xf32>
    %158 = arith.maximumf %157, %56 : vector<2x128xf32>
    %159 = vector.broadcast %cst_78 : f32 to vector<2x128xf32>
    %160 = arith.minimumf %159, %158 : vector<2x128xf32>
    %161 = arith.addf %49, %160 : vector<2x128xf32>
    %c1_i32_79 = arith.constant 1 : i32
    %162 = vector.shape_cast %61 : vector<2x128xf32> to vector<1x2x128xf32>
    %cst_80 = arith.constant dense<0.000000e+00> : vector<1xf32>
    %163 = vector.multi_reduction <add>, %162, %cst_80 [1, 2] : vector<1x2x128xf32> to vector<1xf32>
    %164 = vector.shape_cast %163 : vector<1xf32> to vector<1x1x1xf32>
    %165 = vector.extract %164[0, 0, 0] : f32 from vector<1x1x1xf32>
    %cst_81 = arith.constant 0.000000e+00 : f32
    %166 = arith.addf %165, %cst_81 : f32
    %cst_82 = arith.constant 3.906250e-03 : f32
    %167 = arith.mulf %166, %cst_82 : f32
    %168 = vector.shape_cast %66 : vector<2x128xf32> to vector<1x2x128xf32>
    %cst_83 = arith.constant dense<0.000000e+00> : vector<1xf32>
    %169 = vector.multi_reduction <add>, %168, %cst_83 [1, 2] : vector<1x2x128xf32> to vector<1xf32>
    %170 = vector.shape_cast %169 : vector<1xf32> to vector<1x1x1xf32>
    %171 = vector.extract %170[0, 0, 0] : f32 from vector<1x1x1xf32>
    %cst_84 = arith.constant 3.264000e+02 : f32
    %172 = arith.addf %171, %cst_84 : f32
    %cst_85 = arith.constant 3.906250e-03 : f32
    %173 = arith.mulf %172, %cst_85 : f32
    %174 = vector.shape_cast %71 : vector<2x128xf32> to vector<1x2x128xf32>
    %cst_86 = arith.constant dense<0.000000e+00> : vector<1xf32>
    %175 = vector.multi_reduction <add>, %174, %cst_86 [1, 2] : vector<1x2x128xf32> to vector<1xf32>
    %176 = vector.shape_cast %175 : vector<1xf32> to vector<1x1x1xf32>
    %177 = vector.extract %176[0, 0, 0] : f32 from vector<1x1x1xf32>
    %cst_87 = arith.constant 6.528000e+02 : f32
    %178 = arith.addf %177, %cst_87 : f32
    %cst_88 = arith.constant 3.906250e-03 : f32
    %179 = arith.mulf %178, %cst_88 : f32
    %180 = vector.shape_cast %76 : vector<2x128xf32> to vector<1x2x128xf32>
    %cst_89 = arith.constant dense<0.000000e+00> : vector<1xf32>
    %181 = vector.multi_reduction <add>, %180, %cst_89 [1, 2] : vector<1x2x128xf32> to vector<1xf32>
    %182 = vector.shape_cast %181 : vector<1xf32> to vector<1x1x1xf32>
    %183 = vector.extract %182[0, 0, 0] : f32 from vector<1x1x1xf32>
    %cst_90 = arith.constant 9.792000e+02 : f32
    %184 = arith.addf %183, %cst_90 : f32
    %cst_91 = arith.constant 3.906250e-03 : f32
    %185 = arith.mulf %184, %cst_91 : f32
    %186 = vector.shape_cast %81 : vector<2x128xf32> to vector<1x2x128xf32>
    %cst_92 = arith.constant dense<0.000000e+00> : vector<1xf32>
    %187 = vector.multi_reduction <add>, %186, %cst_92 [1, 2] : vector<1x2x128xf32> to vector<1xf32>
    %188 = vector.shape_cast %187 : vector<1xf32> to vector<1x1x1xf32>
    %189 = vector.extract %188[0, 0, 0] : f32 from vector<1x1x1xf32>
    %cst_93 = arith.constant 1.305600e+03 : f32
    %190 = arith.addf %189, %cst_93 : f32
    %cst_94 = arith.constant 3.906250e-03 : f32
    %191 = arith.mulf %190, %cst_94 : f32
    %192 = vector.shape_cast %86 : vector<2x128xf32> to vector<1x2x128xf32>
    %cst_95 = arith.constant dense<0.000000e+00> : vector<1xf32>
    %193 = vector.multi_reduction <add>, %192, %cst_95 [1, 2] : vector<1x2x128xf32> to vector<1xf32>
    %194 = vector.shape_cast %193 : vector<1xf32> to vector<1x1x1xf32>
    %195 = vector.extract %194[0, 0, 0] : f32 from vector<1x1x1xf32>
    %cst_96 = arith.constant 1.632000e+03 : f32
    %196 = arith.addf %195, %cst_96 : f32
    %cst_97 = arith.constant 3.906250e-03 : f32
    %197 = arith.mulf %196, %cst_97 : f32
    %198 = vector.shape_cast %91 : vector<2x128xf32> to vector<1x2x128xf32>
    %cst_98 = arith.constant dense<0.000000e+00> : vector<1xf32>
    %199 = vector.multi_reduction <add>, %198, %cst_98 [1, 2] : vector<1x2x128xf32> to vector<1xf32>
    %200 = vector.shape_cast %199 : vector<1xf32> to vector<1x1x1xf32>
    %201 = vector.extract %200[0, 0, 0] : f32 from vector<1x1x1xf32>
    %cst_99 = arith.constant 1.958400e+03 : f32
    %202 = arith.addf %201, %cst_99 : f32
    %cst_100 = arith.constant 3.906250e-03 : f32
    %203 = arith.mulf %202, %cst_100 : f32
    %204 = vector.shape_cast %96 : vector<2x128xf32> to vector<1x2x128xf32>
    %cst_101 = arith.constant dense<0.000000e+00> : vector<1xf32>
    %205 = vector.multi_reduction <add>, %204, %cst_101 [1, 2] : vector<1x2x128xf32> to vector<1xf32>
    %206 = vector.shape_cast %205 : vector<1xf32> to vector<1x1x1xf32>
    %207 = vector.extract %206[0, 0, 0] : f32 from vector<1x1x1xf32>
    %cst_102 = arith.constant 2.284800e+03 : f32
    %208 = arith.addf %207, %cst_102 : f32
    %cst_103 = arith.constant 3.906250e-03 : f32
    %209 = arith.mulf %208, %cst_103 : f32
    %210 = vector.shape_cast %101 : vector<2x128xf32> to vector<1x2x128xf32>
    %cst_104 = arith.constant dense<0.000000e+00> : vector<1xf32>
    %211 = vector.multi_reduction <add>, %210, %cst_104 [1, 2] : vector<1x2x128xf32> to vector<1xf32>
    %212 = vector.shape_cast %211 : vector<1xf32> to vector<1x1x1xf32>
    %213 = vector.extract %212[0, 0, 0] : f32 from vector<1x1x1xf32>
    %cst_105 = arith.constant 2.611200e+03 : f32
    %214 = arith.addf %213, %cst_105 : f32
    %cst_106 = arith.constant 3.906250e-03 : f32
    %215 = arith.mulf %214, %cst_106 : f32
    %216 = vector.shape_cast %106 : vector<2x128xf32> to vector<1x2x128xf32>
    %cst_107 = arith.constant dense<0.000000e+00> : vector<1xf32>
    %217 = vector.multi_reduction <add>, %216, %cst_107 [1, 2] : vector<1x2x128xf32> to vector<1xf32>
    %218 = vector.shape_cast %217 : vector<1xf32> to vector<1x1x1xf32>
    %219 = vector.extract %218[0, 0, 0] : f32 from vector<1x1x1xf32>
    %cst_108 = arith.constant 2.937600e+03 : f32
    %220 = arith.addf %219, %cst_108 : f32
    %cst_109 = arith.constant 3.906250e-03 : f32
    %221 = arith.mulf %220, %cst_109 : f32
    %222 = vector.shape_cast %111 : vector<2x128xf32> to vector<1x2x128xf32>
    %cst_110 = arith.constant dense<0.000000e+00> : vector<1xf32>
    %223 = vector.multi_reduction <add>, %222, %cst_110 [1, 2] : vector<1x2x128xf32> to vector<1xf32>
    %224 = vector.shape_cast %223 : vector<1xf32> to vector<1x1x1xf32>
    %225 = vector.extract %224[0, 0, 0] : f32 from vector<1x1x1xf32>
    %cst_111 = arith.constant 3.264000e+03 : f32
    %226 = arith.addf %225, %cst_111 : f32
    %cst_112 = arith.constant 3.906250e-03 : f32
    %227 = arith.mulf %226, %cst_112 : f32
    %228 = vector.shape_cast %116 : vector<2x128xf32> to vector<1x2x128xf32>
    %cst_113 = arith.constant dense<0.000000e+00> : vector<1xf32>
    %229 = vector.multi_reduction <add>, %228, %cst_113 [1, 2] : vector<1x2x128xf32> to vector<1xf32>
    %230 = vector.shape_cast %229 : vector<1xf32> to vector<1x1x1xf32>
    %231 = vector.extract %230[0, 0, 0] : f32 from vector<1x1x1xf32>
    %cst_114 = arith.constant 3.590400e+03 : f32
    %232 = arith.addf %231, %cst_114 : f32
    %cst_115 = arith.constant 3.906250e-03 : f32
    %233 = arith.mulf %232, %cst_115 : f32
    %234 = vector.shape_cast %121 : vector<2x128xf32> to vector<1x2x128xf32>
    %cst_116 = arith.constant dense<0.000000e+00> : vector<1xf32>
    %235 = vector.multi_reduction <add>, %234, %cst_116 [1, 2] : vector<1x2x128xf32> to vector<1xf32>
    %236 = vector.shape_cast %235 : vector<1xf32> to vector<1x1x1xf32>
    %237 = vector.extract %236[0, 0, 0] : f32 from vector<1x1x1xf32>
    %cst_117 = arith.constant 3.916800e+03 : f32
    %238 = arith.addf %237, %cst_117 : f32
    %cst_118 = arith.constant 3.906250e-03 : f32
    %239 = arith.mulf %238, %cst_118 : f32
    %240 = vector.shape_cast %126 : vector<2x128xf32> to vector<1x2x128xf32>
    %cst_119 = arith.constant dense<0.000000e+00> : vector<1xf32>
    %241 = vector.multi_reduction <add>, %240, %cst_119 [1, 2] : vector<1x2x128xf32> to vector<1xf32>
    %242 = vector.shape_cast %241 : vector<1xf32> to vector<1x1x1xf32>
    %243 = vector.extract %242[0, 0, 0] : f32 from vector<1x1x1xf32>
    %cst_120 = arith.constant 4.243200e+03 : f32
    %244 = arith.addf %243, %cst_120 : f32
    %cst_121 = arith.constant 3.906250e-03 : f32
    %245 = arith.mulf %244, %cst_121 : f32
    %246 = vector.shape_cast %131 : vector<2x128xf32> to vector<1x2x128xf32>
    %cst_122 = arith.constant dense<0.000000e+00> : vector<1xf32>
    %247 = vector.multi_reduction <add>, %246, %cst_122 [1, 2] : vector<1x2x128xf32> to vector<1xf32>
    %248 = vector.shape_cast %247 : vector<1xf32> to vector<1x1x1xf32>
    %249 = vector.extract %248[0, 0, 0] : f32 from vector<1x1x1xf32>
    %cst_123 = arith.constant 4.569600e+03 : f32
    %250 = arith.addf %249, %cst_123 : f32
    %cst_124 = arith.constant 3.906250e-03 : f32
    %251 = arith.mulf %250, %cst_124 : f32
    %252 = vector.shape_cast %136 : vector<2x128xf32> to vector<1x2x128xf32>
    %cst_125 = arith.constant dense<0.000000e+00> : vector<1xf32>
    %253 = vector.multi_reduction <add>, %252, %cst_125 [1, 2] : vector<1x2x128xf32> to vector<1xf32>
    %254 = vector.shape_cast %253 : vector<1xf32> to vector<1x1x1xf32>
    %255 = vector.extract %254[0, 0, 0] : f32 from vector<1x1x1xf32>
    %cst_126 = arith.constant 4.896000e+03 : f32
    %256 = arith.addf %255, %cst_126 : f32
    %cst_127 = arith.constant 3.906250e-03 : f32
    %257 = arith.mulf %256, %cst_127 : f32
    %258 = vector.shape_cast %141 : vector<2x128xf32> to vector<1x2x128xf32>
    %cst_128 = arith.constant dense<0.000000e+00> : vector<1xf32>
    %259 = vector.multi_reduction <add>, %258, %cst_128 [1, 2] : vector<1x2x128xf32> to vector<1xf32>
    %260 = vector.shape_cast %259 : vector<1xf32> to vector<1x1x1xf32>
    %261 = vector.extract %260[0, 0, 0] : f32 from vector<1x1x1xf32>
    %cst_129 = arith.constant 5.222400e+03 : f32
    %262 = arith.addf %261, %cst_129 : f32
    %cst_130 = arith.constant 3.906250e-03 : f32
    %263 = arith.mulf %262, %cst_130 : f32
    %264 = vector.shape_cast %146 : vector<2x128xf32> to vector<1x2x128xf32>
    %cst_131 = arith.constant dense<0.000000e+00> : vector<1xf32>
    %265 = vector.multi_reduction <add>, %264, %cst_131 [1, 2] : vector<1x2x128xf32> to vector<1xf32>
    %266 = vector.shape_cast %265 : vector<1xf32> to vector<1x1x1xf32>
    %267 = vector.extract %266[0, 0, 0] : f32 from vector<1x1x1xf32>
    %cst_132 = arith.constant 5.548800e+03 : f32
    %268 = arith.addf %267, %cst_132 : f32
    %cst_133 = arith.constant 3.906250e-03 : f32
    %269 = arith.mulf %268, %cst_133 : f32
    %270 = vector.shape_cast %151 : vector<2x128xf32> to vector<1x2x128xf32>
    %cst_134 = arith.constant dense<0.000000e+00> : vector<1xf32>
    %271 = vector.multi_reduction <add>, %270, %cst_134 [1, 2] : vector<1x2x128xf32> to vector<1xf32>
    %272 = vector.shape_cast %271 : vector<1xf32> to vector<1x1x1xf32>
    %273 = vector.extract %272[0, 0, 0] : f32 from vector<1x1x1xf32>
    %cst_135 = arith.constant 5.875200e+03 : f32
    %274 = arith.addf %273, %cst_135 : f32
    %cst_136 = arith.constant 3.906250e-03 : f32
    %275 = arith.mulf %274, %cst_136 : f32
    %276 = vector.shape_cast %156 : vector<2x128xf32> to vector<1x2x128xf32>
    %cst_137 = arith.constant dense<0.000000e+00> : vector<1xf32>
    %277 = vector.multi_reduction <add>, %276, %cst_137 [1, 2] : vector<1x2x128xf32> to vector<1xf32>
    %278 = vector.shape_cast %277 : vector<1xf32> to vector<1x1x1xf32>
    %279 = vector.extract %278[0, 0, 0] : f32 from vector<1x1x1xf32>
    %cst_138 = arith.constant 6.201600e+03 : f32
    %280 = arith.addf %279, %cst_138 : f32
    %cst_139 = arith.constant 3.906250e-03 : f32
    %281 = arith.mulf %280, %cst_139 : f32
    %282 = vector.shape_cast %161 : vector<2x128xf32> to vector<1x2x128xf32>
    %cst_140 = arith.constant dense<0.000000e+00> : vector<1xf32>
    %283 = vector.multi_reduction <add>, %282, %cst_140 [1, 2] : vector<1x2x128xf32> to vector<1xf32>
    %284 = vector.shape_cast %283 : vector<1xf32> to vector<1x1x1xf32>
    %285 = vector.extract %284[0, 0, 0] : f32 from vector<1x1x1xf32>
    %cst_141 = arith.constant 6.528000e+03 : f32
    %286 = arith.addf %285, %cst_141 : f32
    %cst_142 = arith.constant 3.906250e-03 : f32
    %287 = arith.mulf %286, %cst_142 : f32
    %288 = arith.subf %173, %167 : f32
    %289 = arith.subf %179, %173 : f32
    %290 = arith.subf %185, %179 : f32
    %291 = arith.subf %191, %185 : f32
    %292 = arith.subf %197, %191 : f32
    %293 = arith.subf %203, %197 : f32
    %294 = arith.subf %209, %203 : f32
    %295 = arith.subf %215, %209 : f32
    %296 = arith.subf %221, %215 : f32
    %297 = arith.subf %227, %221 : f32
    %298 = arith.subf %233, %227 : f32
    %299 = arith.subf %239, %233 : f32
    %300 = arith.subf %245, %239 : f32
    %301 = arith.subf %251, %245 : f32
    %302 = arith.subf %257, %251 : f32
    %303 = arith.subf %263, %257 : f32
    %304 = arith.subf %269, %263 : f32
    %305 = arith.subf %275, %269 : f32
    %306 = arith.subf %281, %275 : f32
    %307 = arith.subf %287, %281 : f32
    %cst_143 = arith.constant 0.000000e+00 : f32
    %308 = arith.mulf %288, %cst_143 : f32
    %309 = arith.subf %167, %308 : f32
    %cst_144 = arith.constant 1.000000e+00 : f32
    %310 = arith.mulf %289, %cst_144 : f32
    %311 = arith.subf %309, %310 : f32
    %cst_145 = arith.constant 2.000000e+00 : f32
    %312 = arith.mulf %290, %cst_145 : f32
    %313 = arith.subf %311, %312 : f32
    %cst_146 = arith.constant 3.000000e+00 : f32
    %314 = arith.mulf %291, %cst_146 : f32
    %315 = arith.subf %313, %314 : f32
    %cst_147 = arith.constant 4.000000e+00 : f32
    %316 = arith.mulf %292, %cst_147 : f32
    %317 = arith.subf %315, %316 : f32
    %cst_148 = arith.constant 5.000000e+00 : f32
    %318 = arith.mulf %293, %cst_148 : f32
    %319 = arith.subf %317, %318 : f32
    %cst_149 = arith.constant 6.000000e+00 : f32
    %320 = arith.mulf %294, %cst_149 : f32
    %321 = arith.subf %319, %320 : f32
    %cst_150 = arith.constant 7.000000e+00 : f32
    %322 = arith.mulf %295, %cst_150 : f32
    %323 = arith.subf %321, %322 : f32
    %cst_151 = arith.constant 8.000000e+00 : f32
    %324 = arith.mulf %296, %cst_151 : f32
    %325 = arith.subf %323, %324 : f32
    %cst_152 = arith.constant 9.000000e+00 : f32
    %326 = arith.mulf %297, %cst_152 : f32
    %327 = arith.subf %325, %326 : f32
    %cst_153 = arith.constant 1.000000e+01 : f32
    %328 = arith.mulf %298, %cst_153 : f32
    %329 = arith.subf %327, %328 : f32
    %cst_154 = arith.constant 1.100000e+01 : f32
    %330 = arith.mulf %299, %cst_154 : f32
    %331 = arith.subf %329, %330 : f32
    %cst_155 = arith.constant 1.200000e+01 : f32
    %332 = arith.mulf %300, %cst_155 : f32
    %333 = arith.subf %331, %332 : f32
    %cst_156 = arith.constant 1.300000e+01 : f32
    %334 = arith.mulf %301, %cst_156 : f32
    %335 = arith.subf %333, %334 : f32
    %cst_157 = arith.constant 1.400000e+01 : f32
    %336 = arith.mulf %302, %cst_157 : f32
    %337 = arith.subf %335, %336 : f32
    %cst_158 = arith.constant 1.500000e+01 : f32
    %338 = arith.mulf %303, %cst_158 : f32
    %339 = arith.subf %337, %338 : f32
    %cst_159 = arith.constant 1.600000e+01 : f32
    %340 = arith.mulf %304, %cst_159 : f32
    %341 = arith.subf %339, %340 : f32
    %cst_160 = arith.constant 1.700000e+01 : f32
    %342 = arith.mulf %305, %cst_160 : f32
    %343 = arith.subf %341, %342 : f32
    %cst_161 = arith.constant 1.800000e+01 : f32
    %344 = arith.mulf %306, %cst_161 : f32
    %345 = arith.subf %343, %344 : f32
    %cst_162 = arith.constant 1.900000e+01 : f32
    %346 = arith.mulf %307, %cst_162 : f32
    %347 = arith.subf %345, %346 : f32
    %348 = vector.broadcast %288 : f32 to vector<2x128xf32>
    %349 = arith.mulf %348, %24 : vector<2x128xf32>
    %350 = vector.broadcast %289 : f32 to vector<2x128xf32>
    %351 = arith.mulf %350, %24 : vector<2x128xf32>
    %352 = vector.broadcast %290 : f32 to vector<2x128xf32>
    %353 = arith.mulf %352, %24 : vector<2x128xf32>
    %354 = vector.broadcast %291 : f32 to vector<2x128xf32>
    %355 = arith.mulf %354, %24 : vector<2x128xf32>
    %356 = vector.broadcast %292 : f32 to vector<2x128xf32>
    %357 = arith.mulf %356, %24 : vector<2x128xf32>
    %358 = vector.broadcast %293 : f32 to vector<2x128xf32>
    %359 = arith.mulf %358, %24 : vector<2x128xf32>
    %360 = vector.broadcast %294 : f32 to vector<2x128xf32>
    %361 = arith.mulf %360, %24 : vector<2x128xf32>
    %362 = vector.broadcast %295 : f32 to vector<2x128xf32>
    %363 = arith.mulf %362, %24 : vector<2x128xf32>
    %364 = vector.broadcast %296 : f32 to vector<2x128xf32>
    %365 = arith.mulf %364, %24 : vector<2x128xf32>
    %366 = vector.broadcast %297 : f32 to vector<2x128xf32>
    %367 = arith.mulf %366, %24 : vector<2x128xf32>
    %368 = vector.broadcast %298 : f32 to vector<2x128xf32>
    %369 = arith.mulf %368, %24 : vector<2x128xf32>
    %370 = vector.broadcast %299 : f32 to vector<2x128xf32>
    %371 = arith.mulf %370, %24 : vector<2x128xf32>
    %372 = vector.broadcast %300 : f32 to vector<2x128xf32>
    %373 = arith.mulf %372, %24 : vector<2x128xf32>
    %374 = vector.broadcast %301 : f32 to vector<2x128xf32>
    %375 = arith.mulf %374, %24 : vector<2x128xf32>
    %376 = vector.broadcast %302 : f32 to vector<2x128xf32>
    %377 = arith.mulf %376, %24 : vector<2x128xf32>
    %378 = vector.broadcast %303 : f32 to vector<2x128xf32>
    %379 = arith.mulf %378, %24 : vector<2x128xf32>
    %380 = vector.broadcast %304 : f32 to vector<2x128xf32>
    %381 = arith.mulf %380, %24 : vector<2x128xf32>
    %382 = vector.broadcast %305 : f32 to vector<2x128xf32>
    %383 = arith.mulf %382, %24 : vector<2x128xf32>
    %384 = vector.broadcast %306 : f32 to vector<2x128xf32>
    %385 = arith.mulf %384, %24 : vector<2x128xf32>
    %386 = vector.broadcast %307 : f32 to vector<2x128xf32>
    %387 = arith.mulf %386, %24 : vector<2x128xf32>
    %388 = vector.broadcast %347 : f32 to vector<2x128xf32>
    %389 = arith.mulf %388, %24 : vector<2x128xf32>
    %390 = vector.broadcast %20 : f32 to vector<2x128xf32>
    %391 = arith.mulf %390, %24 : vector<2x128xf32>
    %392 = arith.mulf %12, %20 : f32
    %393 = vector.broadcast %392 : f32 to vector<2x128xf32>
    %394 = arith.mulf %393, %24 : vector<2x128xf32>
    %cst_163 = arith.constant 0x7F800000 : f32
    %395 = vector.broadcast %cst_163 : f32 to vector<2x128xf32>
    %cst_164 = arith.constant 0xFF800000 : f32
    %396 = vector.broadcast %cst_164 : f32 to vector<2x128xf32>
    %c0_i32_165 = arith.constant 0 : i32
    %c2_i32_166 = arith.constant 2 : i32
    %397 = arith.muli %c0_i32_165, %c2_i32_166 : i32
    %398 = tpu.assume_multiple %397, 2 : i32
    %c0_167 = arith.constant 0 : index
    %c0_168 = arith.constant 0 : index
    %399 = arith.index_cast %398 : i32 to index
    %c0_169 = arith.constant 0 : index
    %400 = vector.load %arg2[%c0_167, %c0_168, %399, %c0_169] : memref<1x1x2x128xf32, #tpu.memory_space<vmem>>, vector<1x1x2x128xf32>
    %401 = vector.shape_cast %400 : vector<1x1x2x128xf32> to vector<2x128xf32>
    %402 = arith.mulf %401, %391 : vector<2x128xf32>
    %403 = arith.subf %402, %394 : vector<2x128xf32>
    %cst_170 = arith.constant 0.0784313753 : f32
    %404 = vector.broadcast %cst_170 : f32 to vector<2x128xf32>
    %405 = arith.mulf %403, %404 : vector<2x128xf32>
    %cst_171 = arith.constant 0.000000e+00 : f32
    %cst_172 = arith.constant 1.000000e+00 : f32
    %406 = vector.broadcast %cst_171 : f32 to vector<2x128xf32>
    %407 = arith.maximumf %406, %405 : vector<2x128xf32>
    %408 = vector.broadcast %cst_172 : f32 to vector<2x128xf32>
    %409 = arith.minimumf %408, %407 : vector<2x128xf32>
    %410 = arith.mulf %349, %409 : vector<2x128xf32>
    %cst_173 = arith.constant 1.000000e+00 : f32
    %cst_174 = arith.constant 2.000000e+00 : f32
    %411 = vector.broadcast %cst_173 : f32 to vector<2x128xf32>
    %412 = arith.maximumf %411, %405 : vector<2x128xf32>
    %413 = vector.broadcast %cst_174 : f32 to vector<2x128xf32>
    %414 = arith.minimumf %413, %412 : vector<2x128xf32>
    %415 = arith.mulf %351, %414 : vector<2x128xf32>
    %cst_175 = arith.constant 2.000000e+00 : f32
    %cst_176 = arith.constant 3.000000e+00 : f32
    %416 = vector.broadcast %cst_175 : f32 to vector<2x128xf32>
    %417 = arith.maximumf %416, %405 : vector<2x128xf32>
    %418 = vector.broadcast %cst_176 : f32 to vector<2x128xf32>
    %419 = arith.minimumf %418, %417 : vector<2x128xf32>
    %420 = arith.mulf %353, %419 : vector<2x128xf32>
    %cst_177 = arith.constant 3.000000e+00 : f32
    %cst_178 = arith.constant 4.000000e+00 : f32
    %421 = vector.broadcast %cst_177 : f32 to vector<2x128xf32>
    %422 = arith.maximumf %421, %405 : vector<2x128xf32>
    %423 = vector.broadcast %cst_178 : f32 to vector<2x128xf32>
    %424 = arith.minimumf %423, %422 : vector<2x128xf32>
    %425 = arith.mulf %355, %424 : vector<2x128xf32>
    %cst_179 = arith.constant 4.000000e+00 : f32
    %cst_180 = arith.constant 5.000000e+00 : f32
    %426 = vector.broadcast %cst_179 : f32 to vector<2x128xf32>
    %427 = arith.maximumf %426, %405 : vector<2x128xf32>
    %428 = vector.broadcast %cst_180 : f32 to vector<2x128xf32>
    %429 = arith.minimumf %428, %427 : vector<2x128xf32>
    %430 = arith.mulf %357, %429 : vector<2x128xf32>
    %cst_181 = arith.constant 5.000000e+00 : f32
    %cst_182 = arith.constant 6.000000e+00 : f32
    %431 = vector.broadcast %cst_181 : f32 to vector<2x128xf32>
    %432 = arith.maximumf %431, %405 : vector<2x128xf32>
    %433 = vector.broadcast %cst_182 : f32 to vector<2x128xf32>
    %434 = arith.minimumf %433, %432 : vector<2x128xf32>
    %435 = arith.mulf %359, %434 : vector<2x128xf32>
    %cst_183 = arith.constant 6.000000e+00 : f32
    %cst_184 = arith.constant 7.000000e+00 : f32
    %436 = vector.broadcast %cst_183 : f32 to vector<2x128xf32>
    %437 = arith.maximumf %436, %405 : vector<2x128xf32>
    %438 = vector.broadcast %cst_184 : f32 to vector<2x128xf32>
    %439 = arith.minimumf %438, %437 : vector<2x128xf32>
    %440 = arith.mulf %361, %439 : vector<2x128xf32>
    %cst_185 = arith.constant 7.000000e+00 : f32
    %cst_186 = arith.constant 8.000000e+00 : f32
    %441 = vector.broadcast %cst_185 : f32 to vector<2x128xf32>
    %442 = arith.maximumf %441, %405 : vector<2x128xf32>
    %443 = vector.broadcast %cst_186 : f32 to vector<2x128xf32>
    %444 = arith.minimumf %443, %442 : vector<2x128xf32>
    %445 = arith.mulf %363, %444 : vector<2x128xf32>
    %cst_187 = arith.constant 8.000000e+00 : f32
    %cst_188 = arith.constant 9.000000e+00 : f32
    %446 = vector.broadcast %cst_187 : f32 to vector<2x128xf32>
    %447 = arith.maximumf %446, %405 : vector<2x128xf32>
    %448 = vector.broadcast %cst_188 : f32 to vector<2x128xf32>
    %449 = arith.minimumf %448, %447 : vector<2x128xf32>
    %450 = arith.mulf %365, %449 : vector<2x128xf32>
    %cst_189 = arith.constant 9.000000e+00 : f32
    %cst_190 = arith.constant 1.000000e+01 : f32
    %451 = vector.broadcast %cst_189 : f32 to vector<2x128xf32>
    %452 = arith.maximumf %451, %405 : vector<2x128xf32>
    %453 = vector.broadcast %cst_190 : f32 to vector<2x128xf32>
    %454 = arith.minimumf %453, %452 : vector<2x128xf32>
    %455 = arith.mulf %367, %454 : vector<2x128xf32>
    %cst_191 = arith.constant 1.000000e+01 : f32
    %cst_192 = arith.constant 1.100000e+01 : f32
    %456 = vector.broadcast %cst_191 : f32 to vector<2x128xf32>
    %457 = arith.maximumf %456, %405 : vector<2x128xf32>
    %458 = vector.broadcast %cst_192 : f32 to vector<2x128xf32>
    %459 = arith.minimumf %458, %457 : vector<2x128xf32>
    %460 = arith.mulf %369, %459 : vector<2x128xf32>
    %cst_193 = arith.constant 1.100000e+01 : f32
    %cst_194 = arith.constant 1.200000e+01 : f32
    %461 = vector.broadcast %cst_193 : f32 to vector<2x128xf32>
    %462 = arith.maximumf %461, %405 : vector<2x128xf32>
    %463 = vector.broadcast %cst_194 : f32 to vector<2x128xf32>
    %464 = arith.minimumf %463, %462 : vector<2x128xf32>
    %465 = arith.mulf %371, %464 : vector<2x128xf32>
    %cst_195 = arith.constant 1.200000e+01 : f32
    %cst_196 = arith.constant 1.300000e+01 : f32
    %466 = vector.broadcast %cst_195 : f32 to vector<2x128xf32>
    %467 = arith.maximumf %466, %405 : vector<2x128xf32>
    %468 = vector.broadcast %cst_196 : f32 to vector<2x128xf32>
    %469 = arith.minimumf %468, %467 : vector<2x128xf32>
    %470 = arith.mulf %373, %469 : vector<2x128xf32>
    %cst_197 = arith.constant 1.300000e+01 : f32
    %cst_198 = arith.constant 1.400000e+01 : f32
    %471 = vector.broadcast %cst_197 : f32 to vector<2x128xf32>
    %472 = arith.maximumf %471, %405 : vector<2x128xf32>
    %473 = vector.broadcast %cst_198 : f32 to vector<2x128xf32>
    %474 = arith.minimumf %473, %472 : vector<2x128xf32>
    %475 = arith.mulf %375, %474 : vector<2x128xf32>
    %cst_199 = arith.constant 1.400000e+01 : f32
    %cst_200 = arith.constant 1.500000e+01 : f32
    %476 = vector.broadcast %cst_199 : f32 to vector<2x128xf32>
    %477 = arith.maximumf %476, %405 : vector<2x128xf32>
    %478 = vector.broadcast %cst_200 : f32 to vector<2x128xf32>
    %479 = arith.minimumf %478, %477 : vector<2x128xf32>
    %480 = arith.mulf %377, %479 : vector<2x128xf32>
    %cst_201 = arith.constant 1.500000e+01 : f32
    %cst_202 = arith.constant 1.600000e+01 : f32
    %481 = vector.broadcast %cst_201 : f32 to vector<2x128xf32>
    %482 = arith.maximumf %481, %405 : vector<2x128xf32>
    %483 = vector.broadcast %cst_202 : f32 to vector<2x128xf32>
    %484 = arith.minimumf %483, %482 : vector<2x128xf32>
    %485 = arith.mulf %379, %484 : vector<2x128xf32>
    %cst_203 = arith.constant 1.600000e+01 : f32
    %cst_204 = arith.constant 1.700000e+01 : f32
    %486 = vector.broadcast %cst_203 : f32 to vector<2x128xf32>
    %487 = arith.maximumf %486, %405 : vector<2x128xf32>
    %488 = vector.broadcast %cst_204 : f32 to vector<2x128xf32>
    %489 = arith.minimumf %488, %487 : vector<2x128xf32>
    %490 = arith.mulf %381, %489 : vector<2x128xf32>
    %cst_205 = arith.constant 1.700000e+01 : f32
    %cst_206 = arith.constant 1.800000e+01 : f32
    %491 = vector.broadcast %cst_205 : f32 to vector<2x128xf32>
    %492 = arith.maximumf %491, %405 : vector<2x128xf32>
    %493 = vector.broadcast %cst_206 : f32 to vector<2x128xf32>
    %494 = arith.minimumf %493, %492 : vector<2x128xf32>
    %495 = arith.mulf %383, %494 : vector<2x128xf32>
    %cst_207 = arith.constant 1.800000e+01 : f32
    %cst_208 = arith.constant 1.900000e+01 : f32
    %496 = vector.broadcast %cst_207 : f32 to vector<2x128xf32>
    %497 = arith.maximumf %496, %405 : vector<2x128xf32>
    %498 = vector.broadcast %cst_208 : f32 to vector<2x128xf32>
    %499 = arith.minimumf %498, %497 : vector<2x128xf32>
    %500 = arith.mulf %385, %499 : vector<2x128xf32>
    %cst_209 = arith.constant 1.900000e+01 : f32
    %cst_210 = arith.constant 2.000000e+01 : f32
    %501 = vector.broadcast %cst_209 : f32 to vector<2x128xf32>
    %502 = arith.maximumf %501, %405 : vector<2x128xf32>
    %503 = vector.broadcast %cst_210 : f32 to vector<2x128xf32>
    %504 = arith.minimumf %503, %502 : vector<2x128xf32>
    %505 = arith.mulf %387, %504 : vector<2x128xf32>
    %506 = arith.addf %410, %415 : vector<2x128xf32>
    %507 = arith.addf %420, %425 : vector<2x128xf32>
    %508 = arith.addf %430, %435 : vector<2x128xf32>
    %509 = arith.addf %440, %445 : vector<2x128xf32>
    %510 = arith.addf %450, %455 : vector<2x128xf32>
    %511 = arith.addf %460, %465 : vector<2x128xf32>
    %512 = arith.addf %470, %475 : vector<2x128xf32>
    %513 = arith.addf %480, %485 : vector<2x128xf32>
    %514 = arith.addf %490, %495 : vector<2x128xf32>
    %515 = arith.addf %500, %505 : vector<2x128xf32>
    %516 = arith.addf %506, %507 : vector<2x128xf32>
    %517 = arith.addf %508, %509 : vector<2x128xf32>
    %518 = arith.addf %510, %511 : vector<2x128xf32>
    %519 = arith.addf %512, %513 : vector<2x128xf32>
    %520 = arith.addf %514, %515 : vector<2x128xf32>
    %521 = arith.addf %516, %517 : vector<2x128xf32>
    %522 = arith.addf %518, %519 : vector<2x128xf32>
    %523 = arith.addf %520, %389 : vector<2x128xf32>
    %524 = arith.addf %521, %522 : vector<2x128xf32>
    %525 = arith.addf %524, %523 : vector<2x128xf32>
    %cst_211 = arith.constant 5.000000e-01 : f32
    %526 = vector.broadcast %cst_211 : f32 to vector<2x128xf32>
    %527 = arith.addf %405, %526 : vector<2x128xf32>
    %528 = arith.fptosi %527 : vector<2x128xf32> to vector<2x128xi32>
    %529 = arith.sitofp %528 : vector<2x128xi32> to vector<2x128xf32>
    %cst_212 = arith.constant 1.275000e+01 : f32
    %530 = vector.broadcast %cst_212 : f32 to vector<2x128xf32>
    %531 = arith.mulf %529, %530 : vector<2x128xf32>
    %532 = arith.cmpf oeq, %403, %531 : vector<2x128xf32>
    %cst_213 = arith.constant 2.550000e+02 : f32
    %533 = vector.broadcast %cst_213 : f32 to vector<2x128xf32>
    %534 = arith.cmpf oge, %403, %533 : vector<2x128xf32>
    %535 = arith.ori %532, %534 : vector<2x128xi1>
    %536 = arith.select %535, %403, %525 : vector<2x128xi1>, vector<2x128xf32>
    %c0_214 = arith.constant 0 : index
    %c0_215 = arith.constant 0 : index
    %537 = arith.index_cast %398 : i32 to index
    %c0_216 = arith.constant 0 : index
    %538 = vector.load %arg4[%c0_214, %c0_215, %537, %c0_216] : memref<1x1x2x128xf32, #tpu.memory_space<vmem>>, vector<1x1x2x128xf32>
    %539 = vector.shape_cast %538 : vector<1x1x2x128xf32> to vector<2x128xf32>
    %540 = vector.shape_cast %536 : vector<2x128xf32> to vector<1x1x2x128xf32>
    tpu.vector_store %arg4[%c0_214, %c0_215, %537, %c0_216], %540 {strides = array<i32>} : memref<1x1x2x128xf32, #tpu.memory_space<vmem>>, vector<1x1x2x128xf32>,
    %541 = arith.minimumf %395, %536 : vector<2x128xf32>
    %542 = arith.maximumf %396, %536 : vector<2x128xf32>
    %c1_i32_217 = arith.constant 1 : i32
    %543 = vector.shape_cast %541 : vector<2x128xf32> to vector<1x2x128xf32>
    %cst_218 = arith.constant dense<0x7F800000> : vector<1xf32>
    %544 = vector.multi_reduction <minimumf>, %543, %cst_218 [1, 2] : vector<1x2x128xf32> to vector<1xf32>
    %545 = vector.shape_cast %544 : vector<1xf32> to vector<1x1x1xf32>
    %546 = vector.extract %545[0, 0, 0] : f32 from vector<1x1x1xf32>
    %547 = vector.shape_cast %542 : vector<2x128xf32> to vector<1x2x128xf32>
    %cst_219 = arith.constant dense<0xFF800000> : vector<1xf32>
    %548 = vector.multi_reduction <maximumf>, %547, %cst_219 [1, 2] : vector<1x2x128xf32> to vector<1xf32>
    %549 = vector.shape_cast %548 : vector<1xf32> to vector<1x1x1xf32>
    %550 = vector.extract %549[0, 0, 0] : f32 from vector<1x1x1xf32>
    %551 = arith.subf %550, %546 : f32
    %cst_220 = arith.constant 9.99999974E-6 : f32
    %552 = arith.addf %551, %cst_220 : f32
    %cst_221 = arith.constant 2.550000e+02 : f32
    %553 = arith.divf %cst_221, %552 : f32
    %c0_i32_222 = arith.constant 0 : i32
    %c1_i32_223 = arith.constant 1 : i32
    %554 = arith.muli %c0_i32_222, %c1_i32_223 : i32
    %c0_i32_224 = arith.constant 0 : i32
    %555 = arith.addi %c0_i32_224, %554 : i32
    %c2_i32_225 = arith.constant 2 : i32
    %556 = arith.muli %555, %c2_i32_225 : i32
    %557 = tpu.assume_multiple %556, 2 : i32
    %c0_226 = arith.constant 0 : index
    %c0_227 = arith.constant 0 : index
    %558 = arith.index_cast %557 : i32 to index
    %c0_228 = arith.constant 0 : index
    %559 = vector.load %arg4[%c0_226, %c0_227, %558, %c0_228] : memref<1x1x2x128xf32, #tpu.memory_space<vmem>>, vector<1x1x2x128xf32>
    %560 = vector.shape_cast %559 : vector<1x1x2x128xf32> to vector<2x128xf32>
    %561 = vector.broadcast %546 : f32 to vector<2x128xf32>
    %562 = arith.subf %560, %561 : vector<2x128xf32>
    %563 = vector.broadcast %553 : f32 to vector<2x128xf32>
    %564 = arith.mulf %562, %563 : vector<2x128xf32>
    %c0_229 = arith.constant 0 : index
    %565 = arith.index_cast %557 : i32 to index
    %c0_230 = arith.constant 0 : index
    %566 = vector.load %arg3[%c0_229, %565, %c0_230] : memref<1x2x128xf32, #tpu.memory_space<vmem>>, vector<1x2x128xf32>
    %567 = vector.shape_cast %566 : vector<1x2x128xf32> to vector<2x128xf32>
    %568 = arith.subf %564, %567 : vector<2x128xf32>
    %c0_231 = arith.constant 0 : index
    %c0_232 = arith.constant 0 : index
    %569 = arith.index_cast %557 : i32 to index
    %c0_233 = arith.constant 0 : index
    %570 = vector.load %arg4[%c0_231, %c0_232, %569, %c0_233] : memref<1x1x2x128xf32, #tpu.memory_space<vmem>>, vector<1x1x2x128xf32>
    %571 = vector.shape_cast %570 : vector<1x1x2x128xf32> to vector<2x128xf32>
    %572 = vector.shape_cast %568 : vector<2x128xf32> to vector<1x1x2x128xf32>
    tpu.vector_store %arg4[%c0_231, %c0_232, %569, %c0_233], %572 {strides = array<i32>} : memref<1x1x2x128xf32, #tpu.memory_space<vmem>>, vector<1x1x2x128xf32>,
    %c1_i32_234 = arith.constant 1 : i32
    return
  }
  func.func @transform_0(%arg0: i32, %arg1: i32) -> (i32, i32, i32, i32) {
    %c2_i32 = arith.constant 2 : i32
    %0 = arith.subi %c2_i32, %arg0 : i32
    %c0_i32 = arith.constant 0 : i32
    %c0_i32_0 = arith.constant 0 : i32
    %c0_i32_1 = arith.constant 0 : i32
    return %arg1, %0, %c0_i32, %c0_i32_0 : i32, i32, i32, i32
  }
  func.func @transform_1(%arg0: i32, %arg1: i32) -> (i32, i32, i32) {
    %c0_i32 = arith.constant 0 : i32
    %c0_i32_0 = arith.constant 0 : i32
    %c0_i32_1 = arith.constant 0 : i32
    return %arg0, %c0_i32, %c0_i32_0 : i32, i32, i32
  }
  func.func @transform_2(%arg0: i32, %arg1: i32) -> (i32, i32, i32, i32) {
    %c0_i32 = arith.constant 0 : i32
    %c0_i32_0 = arith.constant 0 : i32
    %c0_i32_1 = arith.constant 0 : i32
    return %arg1, %arg0, %c0_i32, %c0_i32_0 : i32, i32, i32, i32
  }
}

</mosaic_0001>

<llo_original>
// kernel: tpu_custom_call.1
$region0: #{tpu_custom_call.1}
  #allocation0 [shape = 'u32[]', space=smem, size = 0x4, offset = 0x4, fixed_abs, tag = 'smem constant byte address 0x4 - core index']
  #allocation1 [shape = 'u32[144,128]{1,0:T(1,128)}', space=vmem, size = 0x12000, scoped, tag = 'internal scratch']
  %s0 = inlined_call_operand.hbm [shape: f32[2,3,2,128], index: 0, kind: input, shape index: {}]
  %s1 = inlined_call_operand.hbm [shape: f32[3,2,128], index: 1, kind: input, shape index: {}]
  %s2 = inlined_call_operand.hbm [shape: f32[2,3,2,128], index: 2, kind: output, shape index: {}]
  %s3 = sld [smem:[#allocation0]]
  $region49: #{tpu_custom_call.1} parent=0
    _
  %s5 = ssub.s32 1, %s3
  %s6 = scalar_select 0, %s5, %s3
  $region1: #{tpu_custom_call.1} parent=0
    #allocation2 [shape = 'u8[2048]{0}', space=vmem, size = 0x800, scoped, tag = 'input window, operand 0']
    #allocation3 [shape = 's32[2]{0}', space=sflag, size = 0x8, scoped, tag = 'scoped memory for tpu_custom_call.1']
    #allocation4 [shape = 's32[2]{0}', space=sflag, size = 0x8, scoped, tag = 'scoped memory for tpu_custom_call.1']
    #allocation5 [shape = 'u8[2048]{0}', space=vmem, size = 0x800, scoped, tag = 'input window, operand 1']
    #allocation6 [shape = 's32[2]{0}', space=sflag, size = 0x8, scoped, tag = 'scoped memory for tpu_custom_call.1']
    #allocation7 [shape = 'u8[2048]{0}', space=vmem, size = 0x800, scoped, tag = 'output window, operand 0']
    %7 = vsyncpa [#allocation3], 0
    %s8 = scalar_lea.sflag [#allocation3], 1
    %9 = vsyncpa %s8, 0
    %10 = vsyncpa [#allocation6], 0
    %s11 = scalar_lea.sflag [#allocation6], 1
    %12 = vsyncpa %s11, 0
    %13 = vsyncpa [#allocation4], 0
    %s14 = scalar_lea.sflag [#allocation4], 1
    %15 = vsyncpa %s14, 0
    loop: start=0, step=1, limit=8
    $region2: #{tpu_custom_call.1} parent=1 // loop_pre_header
      _
    $region3: #{tpu_custom_call.1} parent=1 // loop_header
      %s17 = sphi 0, %s21
      %p18 = scmp.ge.s32.totalorder %s17, 8
      %s24 = sphi 0, %s36
      %s25 = sphi 0, %s32
      %s26 = sphi 0, %s24
      %s27 = sphi 0, %s25
      %s28 = sphi 0, %s26
      %s29 = sphi 0, %s27
      %s43 = sphi 0, %s45
      %s46 = sphi 0, %s43
      %s47 = sphi 0, %s46
      %s63 = sphi 0, %s47
      %s69 = sphi 0, %s71
      %s72 = sphi 0, %s69
      %s73 = sphi 0, %s72
      %s89 = sphi 0, %s73
      %s97 = sphi 0, %s99
      %s100 = sphi 0, %s97
      %s101 = sphi 0, %s100
      %s117 = sphi 0, %s101
    $region4: #{tpu_custom_call.1} parent=1 // loop_header_branch
      %20 = sbr.rel (%p18) target = $region8
    $region5: #{tpu_custom_call.1} parent=1 // loop_body
      %s22 = ssub.s32 %s17, 1
      %s23 = ssub.s32 %s17, 2
      %s30 = sadd.s32 1, %s25
      %p31 = scmp.ge.s32.totalorder %s30, 2
      %s32 = scalar_select %p31, 0, %s30
      %s33 = sadd.s32 1, %s24
      %s34 = scalar_select %p31, %s33, %s24
      %p35 = scmp.ge.s32.totalorder %s34, 3
      %s36 = scalar_select %p35, 0, %s34
      %s37 = ssub.s32 2, %s24
      %s38 = ssub.s32 2, %s36
      %s39 = ssub.s32 %s25, %s32
      %s40 = ssub.s32 %s37, %s38
      %s41 = sor.u32 %s39, %s40
      %p42 = scmp.eq.s32.totalorder %s41, 0
      %s44 = sadd.s32 %s43, 1
      %s45 = scalar_select %p42, %s43, %s44
      %p48 = pneg %p42
      %p49 = scmp.eq.s32.totalorder %s17, 5
      %p50 = por %p48, %p49
      %p51 = scmp.ne.s32.totalorder %s43, %s46
      %p52 = scmp.eq.s32.totalorder %s17, 0
      %p53 = por %p51, %p52
      %p54 = scmp.ne.s32.totalorder %s43, %s46
      %p55 = scmp.eq.s32.totalorder %s22, 5
      %p56 = por %p54, %p55
      %p57 = scmp.ne.s32.totalorder %s46, %s47
      %p58 = scmp.eq.s32.totalorder %s22, 0
      %p59 = por %p57, %p58
      %p60 = scmp.ne.s32.totalorder %s46, %s47
      %p61 = scmp.eq.s32.totalorder %s23, 5
      %p62 = por %p60, %p61
      %p64 = scmp.ne.s32.totalorder %s47, %s63
      %p65 = scmp.eq.s32.totalorder %s23, 0
      %p66 = por %p64, %p65
      %s67 = ssub.s32 %s24, %s36
      %p68 = scmp.eq.s32.totalorder %s67, 0
      %s70 = sadd.s32 %s69, 1
      %s71 = scalar_select %p68, %s69, %s70
      %p74 = pneg %p68
      %p75 = scmp.eq.s32.totalorder %s17, 5
      %p76 = por %p74, %p75
      %p77 = scmp.ne.s32.totalorder %s69, %s72
      %p78 = scmp.eq.s32.totalorder %s17, 0
      %p79 = por %p77, %p78
      %p80 = scmp.ne.s32.totalorder %s69, %s72
      %p81 = scmp.eq.s32.totalorder %s22, 5
      %p82 = por %p80, %p81
      %p83 = scmp.ne.s32.totalorder %s72, %s73
      %p84 = scmp.eq.s32.totalorder %s22, 0
      %p85 = por %p83, %p84
      %p86 = scmp.ne.s32.totalorder %s72, %s73
      %p87 = scmp.eq.s32.totalorder %s23, 5
      %p88 = por %p86, %p87
      %p90 = scmp.ne.s32.totalorder %s73, %s89
      %p91 = scmp.eq.s32.totalorder %s23, 0
      %p92 = por %p90, %p91
      %s93 = ssub.s32 %s25, %s32
      %s94 = ssub.s32 %s24, %s36
      %s95 = sor.u32 %s93, %s94
      %p96 = scmp.eq.s32.totalorder %s95, 0
      %s98 = sadd.s32 %s97, 1
      %s99 = scalar_select %p96, %s97, %s98
      %p102 = pneg %p96
      %p103 = scmp.eq.s32.totalorder %s17, 5
      %p104 = por %p102, %p103
      %p105 = scmp.ne.s32.totalorder %s97, %s100
      %p106 = scmp.eq.s32.totalorder %s17, 0
      %p107 = por %p105, %p106
      %p108 = scmp.ne.s32.totalorder %s97, %s100
      %p109 = scmp.eq.s32.totalorder %s22, 5
      %p110 = por %p108, %p109
      %p111 = scmp.ne.s32.totalorder %s100, %s101
      %p112 = scmp.eq.s32.totalorder %s22, 0
      %p113 = por %p111, %p112
      %p114 = scmp.ne.s32.totalorder %s100, %s101
      %p115 = scmp.eq.s32.totalorder %s23, 5
      %p116 = por %p114, %p115
      %p118 = scmp.ne.s32.totalorder %s101, %s117
      %p119 = scmp.eq.s32.totalorder %s23, 0
      %p120 = por %p118, %p119
      %p121 = scmp.le.s32.totalorder 1, %s17
      %p122 = scmp.lt.s32.totalorder %s17, 7
      %p123 = pnand %p121, %p122
      %p124 = pneg %p123
      // Predicated region
      $region9: #{tpu_custom_call.1} parent=5 // pred_check
        _
      $region10: #{tpu_custom_call.1} parent=5 // pred_check_branch
        %126 = sbr.rel (%p123) target = $region12
      $region11: #{tpu_custom_call.1} parent=5 // pred_region
        %s127 = ssub.s32 %s17, 1
      $region12: #{tpu_custom_call.1} parent=5 // pred_fallthru
        _
      %p128 = scmp.lt.s32.totalorder %s17, 6
      // Predicated region
      $region13: #{tpu_custom_call.1} parent=5 // pred_check
        %p129 = pneg %p128
      $region14: #{tpu_custom_call.1} parent=5 // pred_check_branch
        %131 = sbr.rel (%p129) target = $region16
      $region15: #{tpu_custom_call.1} parent=5 // pred_region
        // Predicated region
        $region17: #{tpu_custom_call.1} parent=15 // pred_check
          %p132 = pneg %p53
        $region18: #{tpu_custom_call.1} parent=15 // pred_check_branch
          %134 = sbr.rel (%p132) target = $region20
        $region19: #{tpu_custom_call.1} parent=15 // pred_region
          %s135 = sand.u32 %s43, 1
          %s136 = scalar_lea.sflag [#allocation3], %s135
          %s137 = sand.u32 %s43, 1
          %s138 = smul.addr %s137, 2
          %s139 = scalar_lea.vmem [#allocation2], %s138
          %s140 = ssub.s32 2, %s24
          %s142 = ssub.s32 32, 32
          %143 = vsyncadd %s136, %s142
          %s144 = smul.addr %s25, 3
          %s145 = sadd.s32 %s140, %s144
          %s146 = smul.addr %s145, 32
          %s147 = scalar_lea.hbm %s0, %s146
          %s149 = sshll.u32 %s139, 4
          %s150 = int_to_ptr.vmem [resolvable:$true] %s149
          %152 = dma.hbm_to_vmem [thread:$0]  %s147, 32, %s150, %s136
        $region20: #{tpu_custom_call.1} parent=15 // pred_fallthru
          _
        // Predicated region
        $region21: #{tpu_custom_call.1} parent=15 // pred_check
          %p153 = pneg %p79
        $region22: #{tpu_custom_call.1} parent=15 // pred_check_branch
          %155 = sbr.rel (%p153) target = $region24
        $region23: #{tpu_custom_call.1} parent=15 // pred_region
          %s156 = sand.u32 %s69, 1
          %s157 = scalar_lea.sflag [#allocation6], %s156
          %s158 = sand.u32 %s69, 1
          %s159 = smul.addr %s158, 2
          %s160 = scalar_lea.vmem [#allocation5], %s159
          %s162 = ssub.s32 32, 32
          %163 = vsyncadd %s157, %s162
          %s164 = smul.addr %s24, 32
          %s165 = scalar_lea.hbm %s1, %s164
          %s167 = sshll.u32 %s160, 4
          %s168 = int_to_ptr.vmem [resolvable:$true] %s167
          %170 = dma.hbm_to_vmem [thread:$0]  %s165, 32, %s168, %s157
        $region24: #{tpu_custom_call.1} parent=15 // pred_fallthru
          _
      $region16: #{tpu_custom_call.1} parent=5 // pred_fallthru
        _
      %p171 = scmp.le.s32.totalorder 1, %s17
      %p172 = scmp.lt.s32.totalorder %s17, 7
      %p173 = pnand %p171, %p172
      %p174 = pneg %p173
      // Predicated region
      $region25: #{tpu_custom_call.1} parent=5 // pred_check
        _
      $region26: #{tpu_custom_call.1} parent=5 // pred_check_branch
        %176 = sbr.rel (%p173) target = $region28
      $region27: #{tpu_custom_call.1} parent=5 // pred_region
        %s177 = ssub.s32 %s17, 1
        %s178 = sand.u32 %s46, 1
        %s179 = scalar_lea.sflag [#allocation3], %s178
        %s180 = sand.u32 %s46, 1
        %s181 = smul.addr %s180, 2
        %s182 = scalar_lea.vmem [#allocation2], %s181
        // Predicated region
        $region29: #{tpu_custom_call.1} parent=27 // pred_check
          %p183 = pneg %p59
        $region30: #{tpu_custom_call.1} parent=27 // pred_check_branch
          %185 = sbr.rel (%p183) target = $region32
        $region31: #{tpu_custom_call.1} parent=27 // pred_region
          %186 = dma.done %s179, 32
        $region32: #{tpu_custom_call.1} parent=27 // pred_fallthru
          _
        %s187 = sand.u32 %s72, 1
        %s188 = scalar_lea.sflag [#allocation6], %s187
        %s189 = sand.u32 %s72, 1
        %s190 = smul.addr %s189, 2
        %s191 = scalar_lea.vmem [#allocation5], %s190
        // Predicated region
        $region33: #{tpu_custom_call.1} parent=27 // pred_check
          %p192 = pneg %p85
        $region34: #{tpu_custom_call.1} parent=27 // pred_check_branch
          %194 = sbr.rel (%p192) target = $region36
        $region35: #{tpu_custom_call.1} parent=27 // pred_region
          %195 = dma.done %s188, 32
        $region36: #{tpu_custom_call.1} parent=27 // pred_fallthru
          _
        %s196 = sand.u32 %s46, 1
        %s197 = scalar_lea.sflag [#allocation3], %s196
        %s198 = sand.u32 %s46, 1
        %s199 = smul.addr %s198, 2
        %s200 = scalar_lea.vmem [#allocation2], %s199
        %p201 = pneg %p59
        %p202 = pneg %p56
        %s203 = sand.u32 %s72, 1
        %s204 = scalar_lea.sflag [#allocation6], %s203
        %s205 = sand.u32 %s72, 1
        %s206 = smul.addr %s205, 2
        %s207 = scalar_lea.vmem [#allocation5], %s206
        %p208 = pneg %p85
        %p209 = pneg %p82
        %p210 = pneg %p113
        %p211 = pneg %p110
        %s212 = sand.u32 %s100, 1
        %s213 = scalar_lea.sflag [#allocation4], %s212
        %s214 = sand.u32 %s100, 1
        %s215 = smul.addr %s214, 2
        %s216 = scalar_lea.vmem [#allocation7], %s215
        %s217 = ssub.s32 2, %s26
        %v218 = vld [vmem:[%s182] sm:$0x3]
        %vm219 = vcmask 1041408
        %v220 = vsel %vm219, %v218, inf
        %221 = vmin.xlane.f32.xlu0 %v220
        %v222 = vpop.xlane.xlu0 %221
        %v223 = vrot.slane %v222, 4
        %v224 = vmin.f32 %v222, %v223
        %v225 = vrot.slane %v224, 2
        %v226 = vmin.f32 %v224, %v225
        %v227 = vrot.slane %v226, 1
        %v228 = vmin.f32 %v226, %v227
        %s229 = vtos %v228
        %v230 = vsel %vm219, %v218, -inf
        %231 = vmax.xlane.f32.xlu0 %v230
        %v232 = vpop.xlane.xlu0 %231
        %v233 = vrot.slane %v232, 4
        %v234 = vmax.f32 %v232, %v233
        %v235 = vrot.slane %v234, 2
        %v236 = vmax.f32 %v234, %v235
        %v237 = vrot.slane %v236, 1
        %v238 = vmax.f32 %v236, %v237
        %s239 = vtos %v238
        %s240 = ssub.f32 %s239, %s229
        %s241 = smul.f32 %s240, 127.5
        %s242 = sadd.f32 %s241, 1e-05
        %v243 = vstv %s242
        %v244 = vrcp.pop %v243
        %s245 = vtos %v244
        %s246 = smul.f32 32512.5, %s245
        %s247 = smul.f32 %s246, 0.1
        %s248 = smul.f32 %s247, %s229
        %s249 = sadd.f32 %s248, 0.5
        %v250 = vstv %s249
        %v251 = vstv %s247
        %v252 = vmul.f32 %v251, %v218
        %v253 = vsub.f32 %v250, %v252
        %v254 = vmax.f32 %v253, -0.0
        %v255 = vmin.f32 %v254, 1.0
        %v256 = vadd.f32 %v255, 0.0
        %v257 = vmax.f32 %v253, -1.275
        %v258 = vmin.f32 %v257, -0.275
        %v259 = vadd.f32 %v258, 0.0
        %v260 = vmax.f32 %v253, -2.55
        %v261 = vmin.f32 %v260, -1.55
        %v262 = vadd.f32 %v261, 0.0
        %v263 = vmax.f32 %v253, -3.825
        %v264 = vmin.f32 %v263, -2.825
        %v265 = vadd.f32 %v264, 0.0
        %v266 = vmax.f32 %v253, -5.1
        %v267 = vmin.f32 %v266, -4.1
        %v268 = vadd.f32 %v267, 0.0
        %v269 = vmax.f32 %v253, -6.375
        %v270 = vmin.f32 %v269, -5.375
        %v271 = vadd.f32 %v270, 0.0
        %v272 = vmax.f32 %v253, -7.65
        %v273 = vmin.f32 %v272, -6.65
        %v274 = vadd.f32 %v273, 0.0
        %v275 = vmax.f32 %v253, -8.925
        %v276 = vmin.f32 %v275, -7.925
        %v277 = vadd.f32 %v276, 0.0
        %v278 = vmax.f32 %v253, -10.2
        %v279 = vmin.f32 %v278, -9.2
        %v280 = vadd.f32 %v279, 0.0
        %v281 = vmax.f32 %v253, -11.475
        %v282 = vmin.f32 %v281, -10.475
        %v283 = vadd.f32 %v282, 0.0
        %v284 = vmax.f32 %v253, -12.75
        %v285 = vmin.f32 %v284, -11.75
        %v286 = vadd.f32 %v285, 0.0
        %v287 = vmax.f32 %v253, -14.025
        %v288 = vmin.f32 %v287, -13.025
        %v289 = vadd.f32 %v288, 0.0
        %v290 = vmax.f32 %v253, -15.3
        %v291 = vmin.f32 %v290, -14.3
        %v292 = vadd.f32 %v291, 0.0
        %v293 = vmax.f32 %v253, -16.575
        %v294 = vmin.f32 %v293, -15.575
        %v295 = vadd.f32 %v294, 0.0
        %v296 = vmax.f32 %v253, -17.85
        %v297 = vmin.f32 %v296, -16.85
        %v298 = vadd.f32 %v297, 0.0
        %v299 = vmax.f32 %v253, -19.125
        %v300 = vmin.f32 %v299, -18.125
        %v301 = vadd.f32 %v300, 0.0
        %v302 = vmax.f32 %v253, -20.4
        %v303 = vmin.f32 %v302, -19.4
        %v304 = vadd.f32 %v303, 0.0
        %v305 = vmax.f32 %v253, -21.675
        %v306 = vmin.f32 %v305, -20.675
        %v307 = vadd.f32 %v306, 0.0
        %v308 = vmax.f32 %v253, -22.95
        %v309 = vmin.f32 %v308, -21.95
        %v310 = vadd.f32 %v309, 0.0
        %v311 = vmax.f32 %v253, -24.225
        %v312 = vmin.f32 %v311, -23.225
        %v313 = vadd.f32 %v312, 0.0
        %v314 = vmax.f32 %v253, -25.5
        %v315 = vmin.f32 %v314, -24.5
        %v316 = vadd.f32 %v315, 0.0
        %v317 = vsel %vm219, %v256, 0.0
        %318 = vadd.xlane.f32.xlu0 %v317
        %v319 = vpop.xlane.xlu0 %318
        %v320 = vrot.slane %v319, 4
        %v321 = vadd.f32 %v319, %v320
        %v322 = vrot.slane %v321, 2
        %v323 = vadd.f32 %v321, %v322
        %v324 = vrot.slane %v323, 1
        %v325 = vadd.f32 %v323, %v324
        %s326 = vtos %v325
        %s327 = sadd.f32 %s326, 0.0
        %s328 = smul.f32 %s327, 0.00390625
        %v329 = vsel %vm219, %v259, 0.0
        %330 = vadd.xlane.f32.xlu0 %v329
        %v331 = vpop.xlane.xlu0 %330
        %v332 = vrot.slane %v331, 4
        %v333 = vadd.f32 %v331, %v332
        %v334 = vrot.slane %v333, 2
        %v335 = vadd.f32 %v333, %v334
        %v336 = vrot.slane %v335, 1
        %v337 = vadd.f32 %v335, %v336
        %s338 = vtos %v337
        %s339 = sadd.f32 %s338, 326.4
        %s340 = smul.f32 %s339, 0.00390625
        %v341 = vsel %vm219, %v262, 0.0
        %342 = vadd.xlane.f32.xlu0 %v341
        %v343 = vpop.xlane.xlu0 %342
        %v344 = vrot.slane %v343, 4
        %v345 = vadd.f32 %v343, %v344
        %v346 = vrot.slane %v345, 2
        %v347 = vadd.f32 %v345, %v346
        %v348 = vrot.slane %v347, 1
        %v349 = vadd.f32 %v347, %v348
        %s350 = vtos %v349
        %s351 = sadd.f32 %s350, 652.8
        %s352 = smul.f32 %s351, 0.00390625
        %v353 = vsel %vm219, %v265, 0.0
        %354 = vadd.xlane.f32.xlu0 %v353
        %v355 = vpop.xlane.xlu0 %354
        %v356 = vrot.slane %v355, 4
        %v357 = vadd.f32 %v355, %v356
        %v358 = vrot.slane %v357, 2
        %v359 = vadd.f32 %v357, %v358
        %v360 = vrot.slane %v359, 1
        %v361 = vadd.f32 %v359, %v360
        %s362 = vtos %v361
        %s363 = sadd.f32 %s362, 979.2
        %s364 = smul.f32 %s363, 0.00390625
        %v365 = vsel %vm219, %v268, 0.0
        %366 = vadd.xlane.f32.xlu0 %v365
        %v367 = vpop.xlane.xlu0 %366
        %v368 = vrot.slane %v367, 4
        %v369 = vadd.f32 %v367, %v368
        %v370 = vrot.slane %v369, 2
        %v371 = vadd.f32 %v369, %v370
        %v372 = vrot.slane %v371, 1
        %v373 = vadd.f32 %v371, %v372
        %s374 = vtos %v373
        %s375 = sadd.f32 %s374, 1305.6
        %s376 = smul.f32 %s375, 0.00390625
        %v377 = vsel %vm219, %v271, 0.0
        %378 = vadd.xlane.f32.xlu0 %v377
        %v379 = vpop.xlane.xlu0 %378
        %v380 = vrot.slane %v379, 4
        %v381 = vadd.f32 %v379, %v380
        %v382 = vrot.slane %v381, 2
        %v383 = vadd.f32 %v381, %v382
        %v384 = vrot.slane %v383, 1
        %v385 = vadd.f32 %v383, %v384
        %s386 = vtos %v385
        %s387 = sadd.f32 %s386, 1632.0
        %s388 = smul.f32 %s387, 0.00390625
        %v389 = vsel %vm219, %v274, 0.0
        %390 = vadd.xlane.f32.xlu0 %v389
        %v391 = vpop.xlane.xlu0 %390
        %v392 = vrot.slane %v391, 4
        %v393 = vadd.f32 %v391, %v392
        %v394 = vrot.slane %v393, 2
        %v395 = vadd.f32 %v393, %v394
        %v396 = vrot.slane %v395, 1
        %v397 = vadd.f32 %v395, %v396
        %s398 = vtos %v397
        %s399 = sadd.f32 %s398, 1958.4
        %s400 = smul.f32 %s399, 0.00390625
        %v401 = vsel %vm219, %v277, 0.0
        %402 = vadd.xlane.f32.xlu0 %v401
        %v403 = vpop.xlane.xlu0 %402
        %v404 = vrot.slane %v403, 4
        %v405 = vadd.f32 %v403, %v404
        %v406 = vrot.slane %v405, 2
        %v407 = vadd.f32 %v405, %v406
        %v408 = vrot.slane %v407, 1
        %v409 = vadd.f32 %v407, %v408
        %s410 = vtos %v409
        %s411 = sadd.f32 %s410, 2284.8
        %s412 = smul.f32 %s411, 0.00390625
        %v413 = vsel %vm219, %v280, 0.0
        %414 = vadd.xlane.f32.xlu0 %v413
        %v415 = vpop.xlane.xlu0 %414
        %v416 = vrot.slane %v415, 4
        %v417 = vadd.f32 %v415, %v416
        %v418 = vrot.slane %v417, 2
        %v419 = vadd.f32 %v417, %v418
        %v420 = vrot.slane %v419, 1
        %v421 = vadd.f32 %v419, %v420
        %s422 = vtos %v421
        %s423 = sadd.f32 %s422, 2611.2
        %s424 = smul.f32 %s423, 0.00390625
        %v425 = vsel %vm219, %v283, 0.0
        %426 = vadd.xlane.f32.xlu0 %v425
        %v427 = vpop.xlane.xlu0 %426
        %v428 = vrot.slane %v427, 4
        %v429 = vadd.f32 %v427, %v428
        %v430 = vrot.slane %v429, 2
        %v431 = vadd.f32 %v429, %v430
        %v432 = vrot.slane %v431, 1
        %v433 = vadd.f32 %v431, %v432
        %s434 = vtos %v433
        %s435 = sadd.f32 %s434, 2937.6
        %s436 = smul.f32 %s435, 0.00390625
        %v437 = vsel %vm219, %v286, 0.0
        %438 = vadd.xlane.f32.xlu0 %v437
        %v439 = vpop.xlane.xlu0 %438
        %v440 = vrot.slane %v439, 4
        %v441 = vadd.f32 %v439, %v440
        %v442 = vrot.slane %v441, 2
        %v443 = vadd.f32 %v441, %v442
        %v444 = vrot.slane %v443, 1
        %v445 = vadd.f32 %v443, %v444
        %s446 = vtos %v445
        %s447 = sadd.f32 %s446, 3264.0
        %s448 = smul.f32 %s447, 0.00390625
        %v449 = vsel %vm219, %v289, 0.0
        %450 = vadd.xlane.f32.xlu0 %v449
        %v451 = vpop.xlane.xlu0 %450
        %v452 = vrot.slane %v451, 4
        %v453 = vadd.f32 %v451, %v452
        %v454 = vrot.slane %v453, 2
        %v455 = vadd.f32 %v453, %v454
        %v456 = vrot.slane %v455, 1
        %v457 = vadd.f32 %v455, %v456
        %s458 = vtos %v457
        %s459 = sadd.f32 %s458, 3590.4
        %s460 = smul.f32 %s459, 0.00390625
        %v461 = vsel %vm219, %v292, 0.0
        %462 = vadd.xlane.f32.xlu0 %v461
        %v463 = vpop.xlane.xlu0 %462
        %v464 = vrot.slane %v463, 4
        %v465 = vadd.f32 %v463, %v464
        %v466 = vrot.slane %v465, 2
        %v467 = vadd.f32 %v465, %v466
        %v468 = vrot.slane %v467, 1
        %v469 = vadd.f32 %v467, %v468
        %s470 = vtos %v469
        %s471 = sadd.f32 %s470, 3916.8
        %s472 = smul.f32 %s471, 0.00390625
        %v473 = vsel %vm219, %v295, 0.0
        %474 = vadd.xlane.f32.xlu0 %v473
        %v475 = vpop.xlane.xlu0 %474
        %v476 = vrot.slane %v475, 4
        %v477 = vadd.f32 %v475, %v476
        %v478 = vrot.slane %v477, 2
        %v479 = vadd.f32 %v477, %v478
        %v480 = vrot.slane %v479, 1
        %v481 = vadd.f32 %v479, %v480
        %s482 = vtos %v481
        %s483 = sadd.f32 %s482, 4243.2
        %s484 = smul.f32 %s483, 0.00390625
        %v485 = vsel %vm219, %v298, 0.0
        %486 = vadd.xlane.f32.xlu0 %v485
        %v487 = vpop.xlane.xlu0 %486
        %v488 = vrot.slane %v487, 4
        %v489 = vadd.f32 %v487, %v488
        %v490 = vrot.slane %v489, 2
        %v491 = vadd.f32 %v489, %v490
        %v492 = vrot.slane %v491, 1
        %v493 = vadd.f32 %v491, %v492
        %s494 = vtos %v493
        %s495 = sadd.f32 %s494, 4569.6
        %s496 = smul.f32 %s495, 0.00390625
        %v497 = vsel %vm219, %v301, 0.0
        %498 = vadd.xlane.f32.xlu0 %v497
        %v499 = vpop.xlane.xlu0 %498
        %v500 = vrot.slane %v499, 4
        %v501 = vadd.f32 %v499, %v500
        %v502 = vrot.slane %v501, 2
        %v503 = vadd.f32 %v501, %v502
        %v504 = vrot.slane %v503, 1
        %v505 = vadd.f32 %v503, %v504
        %s506 = vtos %v505
        %s507 = sadd.f32 %s506, 4896.0
        %s508 = smul.f32 %s507, 0.00390625
        %v509 = vsel %vm219, %v304, 0.0
        %510 = vadd.xlane.f32.xlu0 %v509
        %v511 = vpop.xlane.xlu0 %510
        %v512 = vrot.slane %v511, 4
        %v513 = vadd.f32 %v511, %v512
        %v514 = vrot.slane %v513, 2
        %v515 = vadd.f32 %v513, %v514
        %v516 = vrot.slane %v515, 1
        %v517 = vadd.f32 %v515, %v516
        %s518 = vtos %v517
        %s519 = sadd.f32 %s518, 5222.4
        %s520 = smul.f32 %s519, 0.00390625
        %v521 = vsel %vm219, %v307, 0.0
        %522 = vadd.xlane.f32.xlu0 %v521
        %v523 = vpop.xlane.xlu0 %522
        %v524 = vrot.slane %v523, 4
        %v525 = vadd.f32 %v523, %v524
        %v526 = vrot.slane %v525, 2
        %v527 = vadd.f32 %v525, %v526
        %v528 = vrot.slane %v527, 1
        %v529 = vadd.f32 %v527, %v528
        %s530 = vtos %v529
        %s531 = sadd.f32 %s530, 5548.8
        %s532 = smul.f32 %s531, 0.00390625
        %v533 = vsel %vm219, %v310, 0.0
        %534 = vadd.xlane.f32.xlu0 %v533
        %v535 = vpop.xlane.xlu0 %534
        %v536 = vrot.slane %v535, 4
        %v537 = vadd.f32 %v535, %v536
        %v538 = vrot.slane %v537, 2
        %v539 = vadd.f32 %v537, %v538
        %v540 = vrot.slane %v539, 1
        %v541 = vadd.f32 %v539, %v540
        %s542 = vtos %v541
        %s543 = sadd.f32 %s542, 5875.2
        %s544 = smul.f32 %s543, 0.00390625
        %v545 = vsel %vm219, %v313, 0.0
        %546 = vadd.xlane.f32.xlu0 %v545
        %v547 = vpop.xlane.xlu0 %546
        %v548 = vrot.slane %v547, 4
        %v549 = vadd.f32 %v547, %v548
        %v550 = vrot.slane %v549, 2
        %v551 = vadd.f32 %v549, %v550
        %v552 = vrot.slane %v551, 1
        %v553 = vadd.f32 %v551, %v552
        %s554 = vtos %v553
        %s555 = sadd.f32 %s554, 6201.6
        %s556 = smul.f32 %s555, 0.00390625
        %v557 = vsel %vm219, %v316, 0.0
        %558 = vadd.xlane.f32.xlu0 %v557
        %v559 = vpop.xlane.xlu0 %558
        %v560 = vrot.slane %v559, 4
        %v561 = vadd.f32 %v559, %v560
        %v562 = vrot.slane %v561, 2
        %v563 = vadd.f32 %v561, %v562
        %v564 = vrot.slane %v563, 1
        %v565 = vadd.f32 %v563, %v564
        %s566 = vtos %v565
        %s567 = sadd.f32 %s566, 6528.0
        %s568 = smul.f32 %s567, 0.00390625
        %s569 = ssub.f32 %s340, %s328
        %s570 = ssub.f32 %s352, %s340
        %s571 = ssub.f32 %s364, %s352
        %s572 = ssub.f32 %s376, %s364
        %s573 = ssub.f32 %s388, %s376
        %s574 = ssub.f32 %s400, %s388
        %s575 = ssub.f32 %s412, %s400
        %s576 = ssub.f32 %s424, %s412
        %s577 = ssub.f32 %s436, %s424
        %s578 = ssub.f32 %s448, %s436
        %s579 = ssub.f32 %s460, %s448
        %s580 = ssub.f32 %s472, %s460
        %s581 = ssub.f32 %s484, %s472
        %s582 = ssub.f32 %s496, %s484
        %s583 = ssub.f32 %s508, %s496
        %s584 = ssub.f32 %s520, %s508
        %s585 = ssub.f32 %s532, %s520
        %s586 = ssub.f32 %s544, %s532
        %s587 = ssub.f32 %s556, %s544
        %s588 = ssub.f32 %s568, %s556
        %s589 = smul.f32 %s569, 0.0
        %s590 = ssub.f32 %s328, %s589
        %s591 = ssub.f32 %s590, %s570
        %s592 = smul.f32 %s571, 2.0
        %s593 = ssub.f32 %s591, %s592
        %s594 = smul.f32 %s572, 3.0
        %s595 = ssub.f32 %s593, %s594
        %s596 = smul.f32 %s573, 4.0
        %s597 = ssub.f32 %s595, %s596
        %s598 = smul.f32 %s574, 5.0
        %s599 = ssub.f32 %s597, %s598
        %s600 = smul.f32 %s575, 6.0
        %s601 = ssub.f32 %s599, %s600
        %s602 = smul.f32 %s576, 7.0
        %s603 = ssub.f32 %s601, %s602
        %s604 = smul.f32 %s577, 8.0
        %s605 = ssub.f32 %s603, %s604
        %s606 = smul.f32 %s578, 9.0
        %s607 = ssub.f32 %s605, %s606
        %s608 = smul.f32 %s579, 10.0
        %s609 = ssub.f32 %s607, %s608
        %s610 = smul.f32 %s580, 11.0
        %s611 = ssub.f32 %s609, %s610
        %s612 = smul.f32 %s581, 12.0
        %s613 = ssub.f32 %s611, %s612
        %s614 = smul.f32 %s582, 13.0
        %s615 = ssub.f32 %s613, %s614
        %s616 = smul.f32 %s583, 14.0
        %s617 = ssub.f32 %s615, %s616
        %s618 = smul.f32 %s584, 15.0
        %s619 = ssub.f32 %s617, %s618
        %s620 = smul.f32 %s585, 16.0
        %s621 = ssub.f32 %s619, %s620
        %s622 = smul.f32 %s586, 17.0
        %s623 = ssub.f32 %s621, %s622
        %s624 = smul.f32 %s587, 18.0
        %s625 = ssub.f32 %s623, %s624
        %s626 = smul.f32 %s588, 19.0
        %s627 = ssub.f32 %s625, %s626
        %v628 = vstv %s569
        %v629 = vstv %s570
        %v630 = vstv %s571
        %v631 = vstv %s572
        %v632 = vstv %s573
        %v633 = vstv %s574
        %v634 = vstv %s575
        %v635 = vstv %s576
        %v636 = vstv %s577
        %v637 = vstv %s578
        %v638 = vstv %s579
        %v639 = vstv %s580
        %v640 = vstv %s581
        %v641 = vstv %s582
        %v642 = vstv %s583
        %v643 = vstv %s584
        %v644 = vstv %s585
        %v645 = vstv %s586
        %v646 = vstv %s587
        %v647 = vstv %s588
        %v648 = vstv %s627
        %v649 = vstv %s246
        %s650 = smul.f32 %s229, %s246
        %v651 = vstv %s650
        %v652 = vmul.f32 %v218, %v649
        %v653 = vsub.f32 %v652, %v651
        %v654 = vmul.f32 %v653, 0.078431375
        %v655 = vmax.f32 %v654, 0.0
        %v656 = vmin.f32 %v655, 1.0
        %v657 = vmul.f32 %v628, %v656
        %v658 = vmax.f32 %v654, 1.0
        %v659 = vmin.f32 %v658, 2.0
        %v660 = vmul.f32 %v629, %v659
        %v661 = vmax.f32 %v654, 2.0
        %v662 = vmin.f32 %v661, 3.0
        %v663 = vmul.f32 %v630, %v662
        %v664 = vmax.f32 %v654, 3.0
        %v665 = vmin.f32 %v664, 4.0
        %v666 = vmul.f32 %v631, %v665
        %v667 = vmax.f32 %v654, 4.0
        %v668 = vmin.f32 %v667, 5.0
        %v669 = vmul.f32 %v632, %v668
        %v670 = vmax.f32 %v654, 5.0
        %v671 = vmin.f32 %v670, 6.0
        %v672 = vmul.f32 %v633, %v671
        %v673 = vmax.f32 %v654, 6.0
        %v674 = vmin.f32 %v673, 7.0
        %v675 = vmul.f32 %v634, %v674
        %v676 = vmax.f32 %v654, 7.0
        %v677 = vmin.f32 %v676, 8.0
        %v678 = vmul.f32 %v635, %v677
        %v679 = vmax.f32 %v654, 8.0
        %v680 = vmin.f32 %v679, 9.0
        %v681 = vmul.f32 %v636, %v680
        %v682 = vmax.f32 %v654, 9.0
        %v683 = vmin.f32 %v682, 10.0
        %v684 = vmul.f32 %v637, %v683
        %v685 = vmax.f32 %v654, 10.0
        %v686 = vmin.f32 %v685, 11.0
        %v687 = vmul.f32 %v638, %v686
        %v688 = vmax.f32 %v654, 11.0
        %v689 = vmin.f32 %v688, 12.0
        %v690 = vmul.f32 %v639, %v689
        %v691 = vmax.f32 %v654, 12.0
        %v692 = vmin.f32 %v691, 13.0
        %v693 = vmul.f32 %v640, %v692
        %v694 = vmax.f32 %v654, 13.0
        %v695 = vmin.f32 %v694, 14.0
        %v696 = vmul.f32 %v641, %v695
        %v697 = vmax.f32 %v654, 14.0
        %v698 = vmin.f32 %v697, 15.0
        %v699 = vmul.f32 %v642, %v698
        %v700 = vmax.f32 %v654, 15.0
        %v701 = vmin.f32 %v700, 16.0
        %v702 = vmul.f32 %v643, %v701
        %v703 = vmax.f32 %v654, 16.0
        %v704 = vmin.f32 %v703, 17.0
        %v705 = vmul.f32 %v644, %v704
        %v706 = vmax.f32 %v654, 17.0
        %v707 = vmin.f32 %v706, 18.0
        %v708 = vmul.f32 %v645, %v707
        %v709 = vmax.f32 %v654, 18.0
        %v710 = vmin.f32 %v709, 19.0
        %v711 = vmul.f32 %v646, %v710
        %v712 = vmax.f32 %v654, 19.0
        %v713 = vmin.f32 %v712, 20.0
        %v714 = vmul.f32 %v647, %v713
        %v715 = vadd.f32 %v657, %v660
        %v716 = vadd.f32 %v663, %v666
        %v717 = vadd.f32 %v669, %v672
        %v718 = vadd.f32 %v675, %v678
        %v719 = vadd.f32 %v681, %v684
        %v720 = vadd.f32 %v687, %v690
        %v721 = vadd.f32 %v693, %v696
        %v722 = vadd.f32 %v699, %v702
        %v723 = vadd.f32 %v705, %v708
        %v724 = vadd.f32 %v711, %v714
        %v725 = vadd.f32 %v715, %v716
        %v726 = vadd.f32 %v717, %v718
        %v727 = vadd.f32 %v719, %v720
        %v728 = vadd.f32 %v721, %v722
        %v729 = vadd.f32 %v723, %v724
        %v730 = vadd.f32 %v725, %v726
        %v731 = vadd.f32 %v727, %v728
        %v732 = vadd.f32 %v729, %v648
        %v733 = vadd.f32 %v730, %v731
        %v734 = vadd.f32 %v733, %v732
        %v735 = vadd.f32 %v654, 0.5
        %v736 = vcvt.f32.s32.to.zero.pseudo %v735
        %v737 = vcvt.s32.f32 %v736
        %v738 = vmul.f32 %v737, 12.75
        %vm739 = vcmp.eq.f32.partialorder %v653, %v738
        %vm740 = vcmp.ge.f32.partialorder %v653, 255.0
        %vm741 = vmor %vm739, %vm740
        %v742 = vsel %vm741, %v653, %v734
        %743 = vst [vmem:[%s216] sm:$0x3] %v742
        %v744 = vsel %vm219, %v742, inf
        %745 = vmin.xlane.f32.xlu0 %v744
        %v746 = vpop.xlane.xlu0 %745
        %v747 = vrot.slane %v746, 4
        %v748 = vmin.f32 %v746, %v747
        %v749 = vrot.slane %v748, 2
        %v750 = vmin.f32 %v748, %v749
        %v751 = vrot.slane %v750, 1
        %v752 = vmin.f32 %v750, %v751
        %s753 = vtos %v752
        %v754 = vsel %vm219, %v742, -inf
        %755 = vmax.xlane.f32.xlu0 %v754
        %v756 = vpop.xlane.xlu0 %755
        %v757 = vrot.slane %v756, 4
        %v758 = vmax.f32 %v756, %v757
        %v759 = vrot.slane %v758, 2
        %v760 = vmax.f32 %v758, %v759
        %v761 = vrot.slane %v760, 1
        %v762 = vmax.f32 %v760, %v761
        %s763 = vtos %v762
        %s764 = ssub.f32 %s763, %s753
        %s765 = sadd.f32 %s764, 1e-05
        %v766 = vstv %s765
        %v767 = vrcp.pop %v766
        %s768 = vtos %v767
        %s769 = smul.f32 255.0, %s768
        %v770 = vld [vmem:[%s216] sm:$0x3]
        %v771 = vstv %s753
        %v772 = vsub.f32 %v770, %v771
        %v773 = vstv %s769
        %v774 = vmul.f32 %v772, %v773
        %v775 = vld [vmem:[%s191] sm:$0x3]
        %v776 = vsub.f32 %v774, %v775
        %777 = vst [vmem:[%s216] sm:$0x3] %v776
        %s778 = sand.u32 %s100, 1
        %s779 = scalar_lea.sflag [#allocation4], %s778
        %s780 = sand.u32 %s100, 1
        %s781 = smul.addr %s780, 2
        %s782 = scalar_lea.vmem [#allocation7], %s781
        // Predicated region
        $region37: #{tpu_custom_call.1} parent=27 // pred_check
          %p783 = pneg %p110
        $region38: #{tpu_custom_call.1} parent=27 // pred_check_branch
          %785 = sbr.rel (%p783) target = $region40
        $region39: #{tpu_custom_call.1} parent=27 // pred_region
          %s787 = ssub.s32 32, 32
          %788 = vsyncadd %s779, %s787
          %s789 = smul.addr %s27, 3
          %s790 = sadd.s32 %s26, %s789
          %s791 = smul.addr %s790, 32
          %s792 = scalar_lea.hbm %s2, %s791
          %s794 = sshll.u32 %s782, 4
          %s795 = int_to_ptr.vmem [resolvable:$true] %s794
          %797 = dma.vmem_to_hbm [thread:$0]  %s795, 32, %s792, %s779
        $region40: #{tpu_custom_call.1} parent=27 // pred_fallthru
          _
      $region28: #{tpu_custom_call.1} parent=5 // pred_fallthru
        _
      %p798 = scmp.le.s32.totalorder 2, %s17
      // Predicated region
      $region41: #{tpu_custom_call.1} parent=5 // pred_check
        %p799 = pneg %p798
      $region42: #{tpu_custom_call.1} parent=5 // pred_check_branch
        %801 = sbr.rel (%p799) target = $region44
      $region43: #{tpu_custom_call.1} parent=5 // pred_region
        %s802 = ssub.s32 %s17, 2
        // Predicated region
        $region45: #{tpu_custom_call.1} parent=43 // pred_check
          %p803 = pneg %p116
        $region46: #{tpu_custom_call.1} parent=43 // pred_check_branch
          %805 = sbr.rel (%p803) target = $region48
        $region47: #{tpu_custom_call.1} parent=43 // pred_region
          %s806 = sand.u32 %s101, 1
          %s807 = scalar_lea.sflag [#allocation4], %s806
          %s808 = sand.u32 %s101, 1
          %s809 = smul.addr %s808, 2
          %s810 = scalar_lea.vmem [#allocation7], %s809
          %811 = dma.done %s807, 32
        $region48: #{tpu_custom_call.1} parent=43 // pred_fallthru
          _
      $region44: #{tpu_custom_call.1} parent=5 // pred_fallthru
        _
    $region6: #{tpu_custom_call.1} parent=1 // loop_footer
      %s21 = sadd.s32 1, %s17
    $region7: #{tpu_custom_call.1} parent=1 // loop_footer_branch
      %16 = sbr.rel target = $region3
    $region8: #{tpu_custom_call.1} parent=1 // loop_exit
      _
    %812 = vsyncpa [#allocation3], 1
    %s813 = scalar_lea.sflag [#allocation3], 1
    %814 = vsyncpa %s813, 1
    %815 = vsyncpa [#allocation6], 1
    %s816 = scalar_lea.sflag [#allocation6], 1
    %817 = vsyncpa %s816, 1
    %818 = vsyncpa [#allocation4], 1
    %s819 = scalar_lea.sflag [#allocation4], 1
    %820 = vsyncpa %s819, 1

</llo_original>
